<compile_context>
chip_gen: v7x
topology: tpu7x:2x2x1
jax: 0.10.0
libtpu: 0.0.40
codegen_flags: <defaults>
</compile_context>

<pallas_src>
import functools

import jax
import jax.numpy as jnp
from jax.experimental import pallas as pl
from jax.experimental.pallas import tpu as pltpu


def _round_up(n, m):
    return ((n + m - 1) // m) * m


def _make_ska_kernel(num_layers, block_b):
    """All SKA layers fused; one batch tile per grid step.

    Ref order (PrefetchScalarGridSpec):
      n_valid (SMEM scalar prefetch),
      x_tile, w_0..w_{L-1}, b_0..b_{L-1},          (inputs)
      d_0..d_{L-1}, sumsq_partial                  (outputs)
    """

    def kernel(*refs):
        n_valid_ref = refs[0]
        x_ref = refs[1]
        w_refs = refs[2:2 + num_layers]
        b_refs = refs[2 + num_layers:2 + 2 * num_layers]
        d_refs = refs[2 + 2 * num_layers:2 + 3 * num_layers]
        sumsq_ref = refs[2 + 3 * num_layers]

        i = pl.program_id(0)
        # Rows of this tile that belong to the real (unpadded) batch.
        row_ids = i * block_b + jax.lax.broadcasted_iota(
            jnp.int32, (block_b, 1), 0)
        valid = row_ids < n_valid_ref[0]

        lane = jax.lax.broadcasted_iota(jnp.int32, (8, 128), 1)
        sumsq_row = jnp.zeros((8, 128), jnp.float32)

        x = x_ref[...]                                # (block_b, in_pad) bf16
        for l in range(num_layers):
            # Knowledge tensor Z_l = X_l @ W_l + b_l: bf16 operands on the MXU,
            # f32 accumulation.  Padded weight cols/rows are zero, so padded
            # lanes of z are exactly 0.
            z = jnp.dot(x, w_refs[l][...],
                        preferred_element_type=jnp.float32) + b_refs[l][...]
            # Per-tile partial sum of squares (padded batch rows masked out).
            zsq = jnp.where(valid, z * z, 0.0)
            sumsq_row = jnp.where(lane == l, jnp.sum(zsq), sumsq_row)
            # Decision tensor D_l = sigmoid(Z_l); feeds the next layer.
            d = jax.nn.sigmoid(z)
            d_refs[l][...] = d.astype(d_refs[l].dtype)
            x = d.astype(jnp.bfloat16)

        # Lane-dense partial-sum tile; cross-tile reduce + sqrt happen once in
        # the wrapper (off the kernel critical path).
        sumsq_ref[...] = sumsq_row.reshape(1, 8, 128)

    return kernel


@functools.partial(jax.jit, static_argnames=("block_b",))
def ska_forward(x, weights, biases, *, block_b=128):
    """Fused SKA forward over all layers, tiled over the batch dimension.

    Returns ([D_0, ..., D_{L-1}], frobenius_norms) with frobenius_norms a
    (num_layers,) device array (no host sync).
    """
    num_layers = len(weights)
    batch = x.shape[0]
    in_dim = 1
    for s in x.shape[1:]:
        in_dim *= s
    x_flat = x.reshape(batch, in_dim)                 # x.view(B, -1)

    out_dims = [int(w.shape[1]) for w in weights]
    out_pads = [_round_up(d, 128) for d in out_dims]
    in_pad = _round_up(in_dim, 128)
    b_pad = max(block_b, _round_up(batch, block_b))
    grid = b_pad // block_b

    # Pad batch / feature dims to lane-friendly sizes; cast matmul operands to
    # bf16 (f32 accumulation happens inside the kernel).
    x_p = jnp.zeros((b_pad, in_pad), jnp.bfloat16)
    x_p = x_p.at[:batch, :in_dim].set(x_flat.astype(jnp.bfloat16))

    w_p, b_p = [], []
    prev_dim, prev_pad = in_dim, in_pad
    for w, b, od, op in zip(weights, biases, out_dims, out_pads):
        wp = jnp.zeros((prev_pad, op), jnp.bfloat16)
        wp = wp.at[:prev_dim, :od].set(w.astype(jnp.bfloat16))
        bp = jnp.zeros((1, op), jnp.float32)
        bp = bp.at[0, :od].set(b.astype(jnp.float32))
        w_p.append(wp)
        b_p.append(bp)
        prev_dim, prev_pad = od, op

    n_valid = jnp.full((1,), batch, dtype=jnp.int32)

    out_shape = tuple(
        jax.ShapeDtypeStruct((b_pad, op), jnp.float32) for op in out_pads
    ) + (jax.ShapeDtypeStruct((grid, 8, 128), jnp.float32),)

    x_spec = pl.BlockSpec((block_b, in_pad), lambda i, n: (i, 0))
    w_specs = [pl.BlockSpec(wp.shape, lambda i, n: (0, 0)) for wp in w_p]
    b_specs = [pl.BlockSpec(bp.shape, lambda i, n: (0, 0)) for bp in b_p]
    d_specs = [pl.BlockSpec((block_b, op), lambda i, n: (i, 0))
               for op in out_pads]
    sumsq_spec = pl.BlockSpec((1, 8, 128), lambda i, n: (i, 0, 0))

    # Explicit VMEM budget: double-buffered batch tiles + resident weights.
    # Independent of total batch size, so it stays under v7x's 64 MiB.
    vmem_bytes = (
        2 * block_b * in_pad * 2
        + 2 * sum(wp.size * 2 for wp in w_p)
        + 2 * sum(bp.size * 4 for bp in b_p)
        + 2 * block_b * sum(out_pads) * 4
        + 2 * 8 * 128 * 4
        + (1 << 20))
    vmem_limit = int(min(96 * 1024 * 1024,
                         max(16 * 1024 * 1024, 2 * vmem_bytes)))

    outs = pl.pallas_call(
        _make_ska_kernel(num_layers, block_b),
        out_shape=out_shape,
        grid_spec=pltpu.PrefetchScalarGridSpec(
            num_scalar_prefetch=1,
            grid=(grid,),
            in_specs=[x_spec] + w_specs + b_specs,
            out_specs=tuple(d_specs) + (sumsq_spec,),
        ),
        compiler_params=pltpu.CompilerParams(
            dimension_semantics=("parallel",),
            vmem_limit_bytes=vmem_limit,
        ),
    )(n_valid, x_p, *w_p, *b_p)

    d_pad = outs[:num_layers]
    sumsq_partial = outs[num_layers]
    # Cross-tile reduce + sqrt once, outside the kernel.
    fro = jnp.sqrt(jnp.sum(sumsq_partial[:, 0, :num_layers], axis=0))
    d_list = [dp[:batch, :od] for dp, od in zip(d_pad, out_dims)]
    return d_list, fro


class SKAModelPallas:
    """JAX/Pallas re-implementation of SKAModel.forward (batch-tiled fused kernel)."""

    def __init__(self, input_size=784, layer_sizes=(256, 128, 64, 10), seed=0,
                 block_b=128):
        self.input_size = input_size
        self.layer_sizes = list(layer_sizes)
        self.block_b = block_b            # 128 (v5e); 256 is a good choice on v6e/v7x
        key = jax.random.PRNGKey(seed)
        self.weights, self.biases = [], []
        prev = input_size
        for size in self.layer_sizes:
            key, sub = jax.random.split(key)
            # torch.randn(prev, size) * 0.01 equivalent (deterministic init)
            self.weights.append(
                jax.random.normal(sub, (prev, size), dtype=jnp.float32) * 0.01)
            self.biases.append(jnp.zeros((size,), dtype=jnp.float32))
            prev = size
        # TODO(synk): Z (pre-activation knowledge tensors) stay in VMEM inside
        # the kernel and are not materialized to HBM; only D and the Frobenius
        # norms come out.
        self.Z = [None] * len(self.layer_sizes)
        self.D = [None] * len(self.layer_sizes)
        self.frobenius_history = [[] for _ in range(len(self.layer_sizes))]
        # One (L,) device array per forward step; synced to per-layer float
        # lists lazily (single transfer) instead of per-layer .item() syncs.
        self._fro_steps = []

    def forward(self, x):
        d_list, fro = ska_forward(x, self.weights, self.biases,
                                  block_b=self.block_b)
        self.D = list(d_list)
        self._fro_steps.append(fro)       # no host sync, no per-layer dispatch
        return d_list[-1]

    def sync_frobenius_history(self):
        """Single host transfer of all recorded Frobenius norms."""
        if self._fro_steps:
            host = jax.device_get(jnp.stack(self._fro_steps))   # (steps, L)
            for l in range(len(self.layer_sizes)):
                self.frobenius_history[l] = [float(v) for v in host[:, l]]
        return self.frobenius_history


def _reference_forward(x, weights, biases):
    """Pure-JAX reference using the same bf16-operand / f32-accumulate math."""
    batch = x.shape[0]
    cur = x.reshape(batch, -1).astype(jnp.bfloat16)
    fros, ds = [], []
    for w, b in zip(weights, biases):
        z = jnp.dot(cur, w.astype(jnp.bfloat16),
                    preferred_element_type=jnp.float32) + b
        fros.append(jnp.sqrt(jnp.sum(z * z)))
        d = jax.nn.sigmoid(z)
        ds.append(d)
        cur = d.astype(jnp.bfloat16)
    return ds, fros


if __name__ == "__main__":
    key = jax.random.PRNGKey(0)
    k1, k2 = jax.random.split(key)

    model = SKAModelPallas(input_size=784, layer_sizes=(256, 128, 64, 10),
                           seed=0)

    # Small MNIST-like batch: (8, 1, 28, 28) NCHW.
    x = jax.random.uniform(k1, (8, 1, 28, 28), dtype=jnp.float32)
    out = jax.block_until_ready(model.forward(x))
    assert out.shape == (8, 10)

    ref_ds, ref_fros = _reference_forward(x, model.weights, model.biases)
    assert jnp.allclose(out, ref_ds[-1], atol=2e-3, rtol=2e-3)
    fro = jax.device_get(model._fro_steps[0])
    for l, rf in enumerate(ref_fros):
        rf = float(rf)
        assert abs(float(fro[l]) - rf) < 2e-3 * max(1.0, rf)

    # Multi-tile grid + padded-row masking: batch=300 (3 tiles, partial last).
    x2 = jax.random.uniform(k2, (300, 1, 28, 28), dtype=jnp.float32)
    d2_list, fro2 = ska_forward(x2, model.weights, model.biases)
    d2 = jax.block_until_ready(d2_list[-1])
    assert d2.shape == (300, 10)
    ref2_ds, ref2_fros = _reference_forward(x2, model.weights, model.biases)
    assert jnp.allclose(d2, ref2_ds[-1], atol=2e-3, rtol=2e-3)
    fro2 = jax.device_get(fro2)
    for l, rf in enumerate(ref2_fros):
        rf = float(rf)
        assert abs(float(fro2[l]) - rf) < 2e-3 * max(1.0, rf)

    # Lazy, single-transfer Frobenius history sync (matches the PyTorch lists).
    hist = model.sync_frobenius_history()
    assert len(hist) == 4 and len(hist[0]) == 1

    print("KERNEL_OK")
</pallas_src>

<mosaic_0001>
module attributes {stable_mosaic.version = 11 : i64} {
  func.func @kernel(%arg0: i32, %arg1: memref<1xi32, #tpu.memory_space<smem>>, %arg2: memref<128x896xbf16, #tpu.memory_space<vmem>>, %arg3: memref<896x256xbf16, #tpu.memory_space<vmem>>, %arg4: memref<256x128xbf16, #tpu.memory_space<vmem>>, %arg5: memref<128x128xbf16, #tpu.memory_space<vmem>>, %arg6: memref<128x128xbf16, #tpu.memory_space<vmem>>, %arg7: memref<1x256xf32, #tpu.memory_space<vmem>>, %arg8: memref<1x128xf32, #tpu.memory_space<vmem>>, %arg9: memref<1x128xf32, #tpu.memory_space<vmem>>, %arg10: memref<1x128xf32, #tpu.memory_space<vmem>>, %arg11: memref<128x256xf32, #tpu.memory_space<vmem>>, %arg12: memref<128x128xf32, #tpu.memory_space<vmem>>, %arg13: memref<128x128xf32, #tpu.memory_space<vmem>>, %arg14: memref<128x128xf32, #tpu.memory_space<vmem>>, %arg15: memref<1x8x128xf32, #tpu.memory_space<vmem>>) attributes {dimension_semantics = [#tpu.dimension_semantics<parallel>], iteration_bounds = array<i64: 1>, scalar_prefetch = 1 : i64, scratch_operands = 0 : i64, tpu.core_type = #tpu.core_type<tc>, window_params = [{transform_indices = @transform_0, window_bounds = array<i64: 128, 896>}, {pipeline_mode = #tpu.pipeline_mode<synchronous>, transform_indices = @transform_1, window_bounds = array<i64: 896, 256>}, {pipeline_mode = #tpu.pipeline_mode<synchronous>, transform_indices = @transform_2, window_bounds = array<i64: 256, 128>}, {pipeline_mode = #tpu.pipeline_mode<synchronous>, transform_indices = @transform_3, window_bounds = array<i64: 128, 128>}, {pipeline_mode = #tpu.pipeline_mode<synchronous>, transform_indices = @transform_4, window_bounds = array<i64: 128, 128>}, {pipeline_mode = #tpu.pipeline_mode<synchronous>, transform_indices = @transform_5, window_bounds = array<i64: 1, 256>}, {pipeline_mode = #tpu.pipeline_mode<synchronous>, transform_indices = @transform_6, window_bounds = array<i64: 1, 128>}, {pipeline_mode = #tpu.pipeline_mode<synchronous>, transform_indices = @transform_7, window_bounds = array<i64: 1, 128>}, {pipeline_mode = #tpu.pipeline_mode<synchronous>, transform_indices = @transform_8, window_bounds = array<i64: 1, 128>}, {transform_indices = @transform_9, window_bounds = array<i64: 128, 256>}, {transform_indices = @transform_10, window_bounds = array<i64: 128, 128>}, {transform_indices = @transform_11, window_bounds = array<i64: 128, 128>}, {transform_indices = @transform_12, window_bounds = array<i64: 128, 128>}, {transform_indices = @transform_13, window_bounds = array<i64: 1, 8, 128>}]} {
    %c128_i32 = arith.constant 128 : i32
    %0 = arith.muli %arg0, %c128_i32 : i32
    %1 = tpu.iota {dimensions = array<i32: 0>} : vector<128x1xi32>
    %2 = vector.broadcast %0 : i32 to vector<128x1xi32>
    %3 = arith.addi %2, %1 : vector<128x1xi32>
    %c0 = arith.constant 0 : index
    %4 = memref.load %arg1[%c0] : memref<1xi32, #tpu.memory_space<smem>>
    %5 = vector.broadcast %4 : i32 to vector<128x1xi32>
    %6 = arith.cmpi slt, %3, %5 : vector<128x1xi32>
    %7 = tpu.iota {dimensions = array<i32: 1>} : vector<8x128xi32>
    %cst = arith.constant 0.000000e+00 : f32
    %8 = vector.broadcast %cst : f32 to vector<8x128xf32>
    %c0_0 = arith.constant 0 : index
    %c0_1 = arith.constant 0 : index
    %9 = vector.load %arg2[%c0_0, %c0_1] : memref<128x896xbf16, #tpu.memory_space<vmem>>, vector<128x896xbf16>
    %c0_2 = arith.constant 0 : index
    %c0_3 = arith.constant 0 : index
    %10 = vector.load %arg3[%c0_2, %c0_3] : memref<896x256xbf16, #tpu.memory_space<vmem>>, vector<896x256xbf16>
    %cst_4 = arith.constant dense<0.000000e+00> : vector<128x256xf32>
    %11 = tpu.matmul %9, %10, %cst_4 {dimension_numbers = #tpu.dot_dimension_numbers<[1], [0], [0], [1], [0, 0, 1, 1], [], []>} : vector<128x896xbf16>, vector<896x256xbf16>, vector<128x256xf32> -> vector<128x256xf32>
    %c0_5 = arith.constant 0 : index
    %c0_6 = arith.constant 0 : index
    %12 = vector.load %arg7[%c0_5, %c0_6] : memref<1x256xf32, #tpu.memory_space<vmem>>, vector<1x256xf32>
    %13 = vector.broadcast %12 : vector<1x256xf32> to vector<128x256xf32>
    %14 = arith.addf %11, %13 : vector<128x256xf32>
    %15 = arith.mulf %14, %14 : vector<128x256xf32>
    %cst_7 = arith.constant 0.000000e+00 : f32
    %16 = vector.shape_cast %6 : vector<128x1xi1> to vector<128x1xi1>
    %17 = vector.broadcast %16 : vector<128x1xi1> to vector<128x256xi1>
    %18 = vector.broadcast %cst_7 : f32 to vector<128x256xf32>
    %19 = arith.select %17, %15, %18 : vector<128x256xi1>, vector<128x256xf32>
    %c0_i32 = arith.constant 0 : i32
    %20 = vector.broadcast %c0_i32 : i32 to vector<8x128xi32>
    %21 = arith.cmpi eq, %7, %20 : vector<8x128xi32>
    %22 = vector.shape_cast %19 : vector<128x256xf32> to vector<1x128x256xf32>
    %cst_8 = arith.constant dense<0.000000e+00> : vector<1xf32>
    %23 = vector.multi_reduction <add>, %22, %cst_8 [1, 2] : vector<1x128x256xf32> to vector<1xf32>
    %24 = vector.shape_cast %23 : vector<1xf32> to vector<1x1x1xf32>
    %25 = vector.extract %24[0, 0, 0] : f32 from vector<1x1x1xf32>
    %26 = vector.broadcast %25 : f32 to vector<8x128xf32>
    %27 = arith.select %21, %26, %8 : vector<8x128xi1>, vector<8x128xf32>
    %28 = arith.negf %14 : vector<128x256xf32>
    %29 = math.exp %28 : vector<128x256xf32>
    %cst_9 = arith.constant 1.000000e+00 : f32
    %30 = vector.broadcast %cst_9 : f32 to vector<128x256xf32>
    %31 = arith.addf %30, %29 : vector<128x256xf32>
    %32 = arith.divf %30, %31 : vector<128x256xf32>
    %c0_10 = arith.constant 0 : index
    %c0_11 = arith.constant 0 : index
    %33 = vector.load %arg11[%c0_10, %c0_11] : memref<128x256xf32, #tpu.memory_space<vmem>>, vector<128x256xf32>
    tpu.vector_store %arg11[%c0_10, %c0_11], %32 {strides = array<i32>} : memref<128x256xf32, #tpu.memory_space<vmem>>, vector<128x256xf32>,
    %34 = arith.truncf %32 : vector<128x256xf32> to vector<128x256xbf16>
    %c0_12 = arith.constant 0 : index
    %c0_13 = arith.constant 0 : index
    %35 = vector.load %arg4[%c0_12, %c0_13] : memref<256x128xbf16, #tpu.memory_space<vmem>>, vector<256x128xbf16>
    %cst_14 = arith.constant dense<0.000000e+00> : vector<128x128xf32>
    %36 = tpu.matmul %34, %35, %cst_14 {dimension_numbers = #tpu.dot_dimension_numbers<[1], [0], [0], [1], [0, 0, 1, 1], [], []>} : vector<128x256xbf16>, vector<256x128xbf16>, vector<128x128xf32> -> vector<128x128xf32>
    %c0_15 = arith.constant 0 : index
    %c0_16 = arith.constant 0 : index
    %37 = vector.load %arg8[%c0_15, %c0_16] : memref<1x128xf32, #tpu.memory_space<vmem>>, vector<1x128xf32>
    %38 = vector.broadcast %37 : vector<1x128xf32> to vector<128x128xf32>
    %39 = arith.addf %36, %38 : vector<128x128xf32>
    %40 = arith.mulf %39, %39 : vector<128x128xf32>
    %cst_17 = arith.constant 0.000000e+00 : f32
    %41 = vector.shape_cast %6 : vector<128x1xi1> to vector<128x1xi1>
    %42 = vector.broadcast %41 : vector<128x1xi1> to vector<128x128xi1>
    %43 = vector.broadcast %cst_17 : f32 to vector<128x128xf32>
    %44 = arith.select %42, %40, %43 : vector<128x128xi1>, vector<128x128xf32>
    %c1_i32 = arith.constant 1 : i32
    %45 = vector.broadcast %c1_i32 : i32 to vector<8x128xi32>
    %46 = arith.cmpi eq, %7, %45 : vector<8x128xi32>
    %47 = vector.shape_cast %44 : vector<128x128xf32> to vector<1x128x128xf32>
    %cst_18 = arith.constant dense<0.000000e+00> : vector<1xf32>
    %48 = vector.multi_reduction <add>, %47, %cst_18 [1, 2] : vector<1x128x128xf32> to vector<1xf32>
    %49 = vector.shape_cast %48 : vector<1xf32> to vector<1x1x1xf32>
    %50 = vector.extract %49[0, 0, 0] : f32 from vector<1x1x1xf32>
    %51 = vector.broadcast %50 : f32 to vector<8x128xf32>
    %52 = arith.select %46, %51, %27 : vector<8x128xi1>, vector<8x128xf32>
    %53 = arith.negf %39 : vector<128x128xf32>
    %54 = math.exp %53 : vector<128x128xf32>
    %cst_19 = arith.constant 1.000000e+00 : f32
    %55 = vector.broadcast %cst_19 : f32 to vector<128x128xf32>
    %56 = arith.addf %55, %54 : vector<128x128xf32>
    %57 = arith.divf %55, %56 : vector<128x128xf32>
    %c0_20 = arith.constant 0 : index
    %c0_21 = arith.constant 0 : index
    %58 = vector.load %arg12[%c0_20, %c0_21] : memref<128x128xf32, #tpu.memory_space<vmem>>, vector<128x128xf32>
    tpu.vector_store %arg12[%c0_20, %c0_21], %57 {strides = array<i32>} : memref<128x128xf32, #tpu.memory_space<vmem>>, vector<128x128xf32>,
    %59 = arith.truncf %57 : vector<128x128xf32> to vector<128x128xbf16>
    %c0_22 = arith.constant 0 : index
    %c0_23 = arith.constant 0 : index
    %60 = vector.load %arg5[%c0_22, %c0_23] : memref<128x128xbf16, #tpu.memory_space<vmem>>, vector<128x128xbf16>
    %cst_24 = arith.constant dense<0.000000e+00> : vector<128x128xf32>
    %61 = tpu.matmul %59, %60, %cst_24 {dimension_numbers = #tpu.dot_dimension_numbers<[1], [0], [0], [1], [0, 0, 1, 1], [], []>} : vector<128x128xbf16>, vector<128x128xbf16>, vector<128x128xf32> -> vector<128x128xf32>
    %c0_25 = arith.constant 0 : index
    %c0_26 = arith.constant 0 : index
    %62 = vector.load %arg9[%c0_25, %c0_26] : memref<1x128xf32, #tpu.memory_space<vmem>>, vector<1x128xf32>
    %63 = vector.broadcast %62 : vector<1x128xf32> to vector<128x128xf32>
    %64 = arith.addf %61, %63 : vector<128x128xf32>
    %65 = arith.mulf %64, %64 : vector<128x128xf32>
    %cst_27 = arith.constant 0.000000e+00 : f32
    %66 = vector.shape_cast %6 : vector<128x1xi1> to vector<128x1xi1>
    %67 = vector.broadcast %66 : vector<128x1xi1> to vector<128x128xi1>
    %68 = vector.broadcast %cst_27 : f32 to vector<128x128xf32>
    %69 = arith.select %67, %65, %68 : vector<128x128xi1>, vector<128x128xf32>
    %c2_i32 = arith.constant 2 : i32
    %70 = vector.broadcast %c2_i32 : i32 to vector<8x128xi32>
    %71 = arith.cmpi eq, %7, %70 : vector<8x128xi32>
    %72 = vector.shape_cast %69 : vector<128x128xf32> to vector<1x128x128xf32>
    %cst_28 = arith.constant dense<0.000000e+00> : vector<1xf32>
    %73 = vector.multi_reduction <add>, %72, %cst_28 [1, 2] : vector<1x128x128xf32> to vector<1xf32>
    %74 = vector.shape_cast %73 : vector<1xf32> to vector<1x1x1xf32>
    %75 = vector.extract %74[0, 0, 0] : f32 from vector<1x1x1xf32>
    %76 = vector.broadcast %75 : f32 to vector<8x128xf32>
    %77 = arith.select %71, %76, %52 : vector<8x128xi1>, vector<8x128xf32>
    %78 = arith.negf %64 : vector<128x128xf32>
    %79 = math.exp %78 : vector<128x128xf32>
    %cst_29 = arith.constant 1.000000e+00 : f32
    %80 = vector.broadcast %cst_29 : f32 to vector<128x128xf32>
    %81 = arith.addf %80, %79 : vector<128x128xf32>
    %82 = arith.divf %80, %81 : vector<128x128xf32>
    %c0_30 = arith.constant 0 : index
    %c0_31 = arith.constant 0 : index
    %83 = vector.load %arg13[%c0_30, %c0_31] : memref<128x128xf32, #tpu.memory_space<vmem>>, vector<128x128xf32>
    tpu.vector_store %arg13[%c0_30, %c0_31], %82 {strides = array<i32>} : memref<128x128xf32, #tpu.memory_space<vmem>>, vector<128x128xf32>,
    %84 = arith.truncf %82 : vector<128x128xf32> to vector<128x128xbf16>
    %c0_32 = arith.constant 0 : index
    %c0_33 = arith.constant 0 : index
    %85 = vector.load %arg6[%c0_32, %c0_33] : memref<128x128xbf16, #tpu.memory_space<vmem>>, vector<128x128xbf16>
    %cst_34 = arith.constant dense<0.000000e+00> : vector<128x128xf32>
    %86 = tpu.matmul %84, %85, %cst_34 {dimension_numbers = #tpu.dot_dimension_numbers<[1], [0], [0], [1], [0, 0, 1, 1], [], []>} : vector<128x128xbf16>, vector<128x128xbf16>, vector<128x128xf32> -> vector<128x128xf32>
    %c0_35 = arith.constant 0 : index
    %c0_36 = arith.constant 0 : index
    %87 = vector.load %arg10[%c0_35, %c0_36] : memref<1x128xf32, #tpu.memory_space<vmem>>, vector<1x128xf32>
    %88 = vector.broadcast %87 : vector<1x128xf32> to vector<128x128xf32>
    %89 = arith.addf %86, %88 : vector<128x128xf32>
    %90 = arith.mulf %89, %89 : vector<128x128xf32>
    %cst_37 = arith.constant 0.000000e+00 : f32
    %91 = vector.shape_cast %6 : vector<128x1xi1> to vector<128x1xi1>
    %92 = vector.broadcast %91 : vector<128x1xi1> to vector<128x128xi1>
    %93 = vector.broadcast %cst_37 : f32 to vector<128x128xf32>
    %94 = arith.select %92, %90, %93 : vector<128x128xi1>, vector<128x128xf32>
    %c3_i32 = arith.constant 3 : i32
    %95 = vector.broadcast %c3_i32 : i32 to vector<8x128xi32>
    %96 = arith.cmpi eq, %7, %95 : vector<8x128xi32>
    %97 = vector.shape_cast %94 : vector<128x128xf32> to vector<1x128x128xf32>
    %cst_38 = arith.constant dense<0.000000e+00> : vector<1xf32>
    %98 = vector.multi_reduction <add>, %97, %cst_38 [1, 2] : vector<1x128x128xf32> to vector<1xf32>
    %99 = vector.shape_cast %98 : vector<1xf32> to vector<1x1x1xf32>
    %100 = vector.extract %99[0, 0, 0] : f32 from vector<1x1x1xf32>
    %101 = vector.broadcast %100 : f32 to vector<8x128xf32>
    %102 = arith.select %96, %101, %77 : vector<8x128xi1>, vector<8x128xf32>
    %103 = arith.negf %89 : vector<128x128xf32>
    %104 = math.exp %103 : vector<128x128xf32>
    %cst_39 = arith.constant 1.000000e+00 : f32
    %105 = vector.broadcast %cst_39 : f32 to vector<128x128xf32>
    %106 = arith.addf %105, %104 : vector<128x128xf32>
    %107 = arith.divf %105, %106 : vector<128x128xf32>
    %c0_40 = arith.constant 0 : index
    %c0_41 = arith.constant 0 : index
    %108 = vector.load %arg14[%c0_40, %c0_41] : memref<128x128xf32, #tpu.memory_space<vmem>>, vector<128x128xf32>
    tpu.vector_store %arg14[%c0_40, %c0_41], %107 {strides = array<i32>} : memref<128x128xf32, #tpu.memory_space<vmem>>, vector<128x128xf32>,
    %109 = vector.shape_cast %102 : vector<8x128xf32> to vector<1x8x128xf32>
    %c0_42 = arith.constant 0 : index
    %c0_43 = arith.constant 0 : index
    %c0_44 = arith.constant 0 : index
    %110 = vector.load %arg15[%c0_42, %c0_43, %c0_44] : memref<1x8x128xf32, #tpu.memory_space<vmem>>, vector<1x8x128xf32>
    tpu.vector_store %arg15[%c0_42, %c0_43, %c0_44], %109 {strides = array<i32>} : memref<1x8x128xf32, #tpu.memory_space<vmem>>, vector<1x8x128xf32>,
    return
  }
  func.func @transform_0(%arg0: i32, %arg1: memref<1xi32, #tpu.memory_space<smem>>) -> (i32, i32) {
    %c0_i32 = arith.constant 0 : i32
    %c0_i32_0 = arith.constant 0 : i32
    return %arg0, %c0_i32 : i32, i32
  }
  func.func @transform_1(%arg0: i32, %arg1: memref<1xi32, #tpu.memory_space<smem>>) -> (i32, i32) {
    %c0_i32 = arith.constant 0 : i32
    %c0_i32_0 = arith.constant 0 : i32
    %c0_i32_1 = arith.constant 0 : i32
    return %c0_i32, %c0_i32_0 : i32, i32
  }
  func.func @transform_2(%arg0: i32, %arg1: memref<1xi32, #tpu.memory_space<smem>>) -> (i32, i32) {
    %c0_i32 = arith.constant 0 : i32
    %c0_i32_0 = arith.constant 0 : i32
    %c0_i32_1 = arith.constant 0 : i32
    return %c0_i32, %c0_i32_0 : i32, i32
  }
  func.func @transform_3(%arg0: i32, %arg1: memref<1xi32, #tpu.memory_space<smem>>) -> (i32, i32) {
    %c0_i32 = arith.constant 0 : i32
    %c0_i32_0 = arith.constant 0 : i32
    %c0_i32_1 = arith.constant 0 : i32
    return %c0_i32, %c0_i32_0 : i32, i32
  }
  func.func @transform_4(%arg0: i32, %arg1: memref<1xi32, #tpu.memory_space<smem>>) -> (i32, i32) {
    %c0_i32 = arith.constant 0 : i32
    %c0_i32_0 = arith.constant 0 : i32
    %c0_i32_1 = arith.constant 0 : i32
    return %c0_i32, %c0_i32_0 : i32, i32
  }
  func.func @transform_5(%arg0: i32, %arg1: memref<1xi32, #tpu.memory_space<smem>>) -> (i32, i32) {
    %c0_i32 = arith.constant 0 : i32
    %c0_i32_0 = arith.constant 0 : i32
    %c0_i32_1 = arith.constant 0 : i32
    return %c0_i32, %c0_i32_0 : i32, i32
  }
  func.func @transform_6(%arg0: i32, %arg1: memref<1xi32, #tpu.memory_space<smem>>) -> (i32, i32) {
    %c0_i32 = arith.constant 0 : i32
    %c0_i32_0 = arith.constant 0 : i32
    %c0_i32_1 = arith.constant 0 : i32
    return %c0_i32, %c0_i32_0 : i32, i32
  }
  func.func @transform_7(%arg0: i32, %arg1: memref<1xi32, #tpu.memory_space<smem>>) -> (i32, i32) {
    %c0_i32 = arith.constant 0 : i32
    %c0_i32_0 = arith.constant 0 : i32
    %c0_i32_1 = arith.constant 0 : i32
    return %c0_i32, %c0_i32_0 : i32, i32
  }
  func.func @transform_8(%arg0: i32, %arg1: memref<1xi32, #tpu.memory_space<smem>>) -> (i32, i32) {
    %c0_i32 = arith.constant 0 : i32
    %c0_i32_0 = arith.constant 0 : i32
    %c0_i32_1 = arith.constant 0 : i32
    return %c0_i32, %c0_i32_0 : i32, i32
  }
  func.func @transform_9(%arg0: i32, %arg1: memref<1xi32, #tpu.memory_space<smem>>) -> (i32, i32) {
    %c0_i32 = arith.constant 0 : i32
    %c0_i32_0 = arith.constant 0 : i32
    return %arg0, %c0_i32 : i32, i32
  }
  func.func @transform_10(%arg0: i32, %arg1: memref<1xi32, #tpu.memory_space<smem>>) -> (i32, i32) {
    %c0_i32 = arith.constant 0 : i32
    %c0_i32_0 = arith.constant 0 : i32
    return %arg0, %c0_i32 : i32, i32
  }
  func.func @transform_11(%arg0: i32, %arg1: memref<1xi32, #tpu.memory_space<smem>>) -> (i32, i32) {
    %c0_i32 = arith.constant 0 : i32
    %c0_i32_0 = arith.constant 0 : i32
    return %arg0, %c0_i32 : i32, i32
  }
  func.func @transform_12(%arg0: i32, %arg1: memref<1xi32, #tpu.memory_space<smem>>) -> (i32, i32) {
    %c0_i32 = arith.constant 0 : i32
    %c0_i32_0 = arith.constant 0 : i32
    return %arg0, %c0_i32 : i32, i32
  }
  func.func @transform_13(%arg0: i32, %arg1: memref<1xi32, #tpu.memory_space<smem>>) -> (i32, i32, i32) {
    %c0_i32 = arith.constant 0 : i32
    %c0_i32_0 = arith.constant 0 : i32
    %c0_i32_1 = arith.constant 0 : i32
    return %arg0, %c0_i32, %c0_i32_0 : i32, i32, i32
  }
}

</mosaic_0001>

<llo_original>
// kernel: ska_forward.1
$region0: #{ska_forward.1}
  #allocation0 [shape = 'u32[]', space=smem, size = 0x4, offset = 0x4, fixed_abs, tag = 'smem constant byte address 0x4 - core index']
  #allocation1 [shape = 'u32[144,128]{1,0:T(1,128)}', space=vmem, size = 0x12000, scoped, tag = 'internal scratch']
  #allocation2 [shape = 's32[1]{0}', space=sflag, size = 0x4, scoped, tag = 'scoped memory for ska_forward.1']
  #allocation3 [shape = 's32[1]{0:T(128)S(6)}', space=smem, size = 0x200, scoped, tag = 'prefetched SMEM operand 0']
  %s0 = inlined_call_operand.<no memory space> [shape: s32[1], index: 0, kind: input, shape index: {}]
  %s1 = inlined_call_operand.vmem [shape: bf16[128,896], index: 1, kind: input, shape index: {}]
  %s2 = inlined_call_operand.vmem [shape: bf16[896,256], index: 2, kind: input, shape index: {}]
  %s3 = inlined_call_operand.vmem [shape: bf16[256,128], index: 3, kind: input, shape index: {}]
  %s4 = inlined_call_operand.vmem [shape: bf16[128,128], index: 4, kind: input, shape index: {}]
  %s5 = inlined_call_operand.vmem [shape: bf16[128,128], index: 5, kind: input, shape index: {}]
  %s6 = inlined_call_operand.vmem [shape: f32[1,256], index: 6, kind: input, shape index: {}]
  %s7 = inlined_call_operand.vmem [shape: f32[1,128], index: 7, kind: input, shape index: {}]
  %s8 = inlined_call_operand.vmem [shape: f32[1,128], index: 8, kind: input, shape index: {}]
  %s9 = inlined_call_operand.vmem [shape: f32[1,128], index: 9, kind: input, shape index: {}]
  %s10 = inlined_call_operand.vmem [shape: f32[128,256], index: 10, kind: output, shape index: {0}]
  %s11 = inlined_call_operand.vmem [shape: f32[128,128], index: 11, kind: output, shape index: {1}]
  %s12 = inlined_call_operand.vmem [shape: f32[128,128], index: 12, kind: output, shape index: {2}]
  %s13 = inlined_call_operand.vmem [shape: f32[128,128], index: 13, kind: output, shape index: {3}]
  %s14 = inlined_call_operand.vmem [shape: f32[1,8,128], index: 14, kind: output, shape index: {4}]
  %15 = xla_tuple %s10, %s11, %s12, %s13, %s14
  %s16 = sld [smem:[#allocation0]]
  $region78: #{ska_forward.1} parent=0
    _
  %s18 = ssub.s32 1, %s16
  %s19 = scalar_select 0, %s18, %s16
  %20 = sst [smem:[#allocation3]] %s0
  // Predicated region
  $region2: #{ska_forward.1} parent=0 // pred_check
    _
  $region3: #{ska_forward.1} parent=0 // pred_check_branch
    %22 = sbr.rel (0) target = $region5
  $region4: #{ska_forward.1} parent=0 // pred_region
    _
  $region5: #{ska_forward.1} parent=0 // pred_fallthru
    _
  // Predicated region
  $region6: #{ska_forward.1} parent=0 // pred_check
    _
  $region7: #{ska_forward.1} parent=0 // pred_check_branch
    %24 = sbr.rel (0) target = $region9
  $region8: #{ska_forward.1} parent=0 // pred_region
    _
  $region9: #{ska_forward.1} parent=0 // pred_fallthru
    _
  // Predicated region
  $region10: #{ska_forward.1} parent=0 // pred_check
    _
  $region11: #{ska_forward.1} parent=0 // pred_check_branch
    %26 = sbr.rel (0) target = $region13
  $region12: #{ska_forward.1} parent=0 // pred_region
    _
  $region13: #{ska_forward.1} parent=0 // pred_fallthru
    _
  // Predicated region
  $region14: #{ska_forward.1} parent=0 // pred_check
    _
  $region15: #{ska_forward.1} parent=0 // pred_check_branch
    %28 = sbr.rel (0) target = $region17
  $region16: #{ska_forward.1} parent=0 // pred_region
    _
  $region17: #{ska_forward.1} parent=0 // pred_fallthru
    _
  // Predicated region
  $region18: #{ska_forward.1} parent=0 // pred_check
    _
  $region19: #{ska_forward.1} parent=0 // pred_check_branch
    %30 = sbr.rel (0) target = $region21
  $region20: #{ska_forward.1} parent=0 // pred_region
    _
  $region21: #{ska_forward.1} parent=0 // pred_fallthru
    _
  // Predicated region
  $region22: #{ska_forward.1} parent=0 // pred_check
    _
  $region23: #{ska_forward.1} parent=0 // pred_check_branch
    %32 = sbr.rel (0) target = $region25
  $region24: #{ska_forward.1} parent=0 // pred_region
    _
  $region25: #{ska_forward.1} parent=0 // pred_fallthru
    _
  // Predicated region
  $region26: #{ska_forward.1} parent=0 // pred_check
    _
  $region27: #{ska_forward.1} parent=0 // pred_check_branch
    %34 = sbr.rel (0) target = $region29
  $region28: #{ska_forward.1} parent=0 // pred_region
    _
  $region29: #{ska_forward.1} parent=0 // pred_fallthru
    _
  // Predicated region
  $region30: #{ska_forward.1} parent=0 // pred_check
    _
  $region31: #{ska_forward.1} parent=0 // pred_check_branch
    %36 = sbr.rel (0) target = $region33
  $region32: #{ska_forward.1} parent=0 // pred_region
    _
  $region33: #{ska_forward.1} parent=0 // pred_fallthru
    _
  // Predicated region
  $region34: #{ska_forward.1} parent=0 // pred_check
    _
  $region35: #{ska_forward.1} parent=0 // pred_check_branch
    %38 = sbr.rel (0) target = $region37
  $region36: #{ska_forward.1} parent=0 // pred_region
    _
  $region37: #{ska_forward.1} parent=0 // pred_fallthru
    _
  %s40 = smul.u32 0, 128
  %v41 = vlaneseq
  %v42 = vshrl.u32 %v41, 7
  %v43 = vadd.s32 %v42, 8
  %v44 = vadd.s32 %v42, 16
  %v45 = vadd.s32 %v42, 24
  %v46 = vadd.s32 %v42, 32
  %v47 = vadd.s32 %v42, 40
  %v48 = vadd.s32 %v42, 48
  %v49 = vadd.s32 %v42, 56
  %v50 = vadd.s32 %v42, 64
  %v51 = vadd.s32 %v42, 72
  %v52 = vadd.s32 %v42, 80
  %v53 = vadd.s32 %v42, 88
  %v54 = vadd.s32 %v42, 96
  %v55 = vadd.s32 %v42, 104
  %v56 = vadd.s32 %v42, 112
  %v57 = vadd.s32 %v42, 120
  %v58 = vstv %s40
  %v59 = vadd.s32 %v58, %v42
  %v60 = vadd.s32 %v58, %v43
  %v61 = vadd.s32 %v58, %v44
  %v62 = vadd.s32 %v58, %v45
  %v63 = vadd.s32 %v58, %v46
  %v64 = vadd.s32 %v58, %v47
  %v65 = vadd.s32 %v58, %v48
  %v66 = vadd.s32 %v58, %v49
  %v67 = vadd.s32 %v58, %v50
  %v68 = vadd.s32 %v58, %v51
  %v69 = vadd.s32 %v58, %v52
  %v70 = vadd.s32 %v58, %v53
  %v71 = vadd.s32 %v58, %v54
  %v72 = vadd.s32 %v58, %v55
  %v73 = vadd.s32 %v58, %v56
  %v74 = vadd.s32 %v58, %v57
  %s75 = sld [smem:[#allocation3]]
  %v76 = vstv %s75
  %vm77 = vcmp.lt.s32.totalorder %v59, %v76
  %vm78 = vcmp.lt.s32.totalorder %v60, %v76
  %vm79 = vcmp.lt.s32.totalorder %v61, %v76
  %vm80 = vcmp.lt.s32.totalorder %v62, %v76
  %vm81 = vcmp.lt.s32.totalorder %v63, %v76
  %vm82 = vcmp.lt.s32.totalorder %v64, %v76
  %vm83 = vcmp.lt.s32.totalorder %v65, %v76
  %vm84 = vcmp.lt.s32.totalorder %v66, %v76
  %vm85 = vcmp.lt.s32.totalorder %v67, %v76
  %vm86 = vcmp.lt.s32.totalorder %v68, %v76
  %vm87 = vcmp.lt.s32.totalorder %v69, %v76
  %vm88 = vcmp.lt.s32.totalorder %v70, %v76
  %vm89 = vcmp.lt.s32.totalorder %v71, %v76
  %vm90 = vcmp.lt.s32.totalorder %v72, %v76
  %vm91 = vcmp.lt.s32.totalorder %v73, %v76
  %vm92 = vcmp.lt.s32.totalorder %v74, %v76
  %v93 = vlaneseq
  %v94 = vand.u32 %v93, 127
  %v95 = vld [vmem:[%s1] sm:$0xff]
  %v96 = vld [vmem:[%s1 + $0x8] sm:$0xff]
  %v97 = vld [vmem:[%s1 + $0x10] sm:$0xff]
  %v98 = vld [vmem:[%s1 + $0x18] sm:$0xf]
  %v99 = vld [vmem:[%s1 + $0x1c] sm:$0xff]
  %v100 = vld [vmem:[%s1 + $0x24] sm:$0xff]
  %v101 = vld [vmem:[%s1 + $0x2c] sm:$0xff]
  %v102 = vld [vmem:[%s1 + $0x34] sm:$0xf]
  %v103 = vld [vmem:[%s1 + $0x38] sm:$0xff]
  %v104 = vld [vmem:[%s1 + $0x40] sm:$0xff]
  %v105 = vld [vmem:[%s1 + $0x48] sm:$0xff]
  %v106 = vld [vmem:[%s1 + $0x50] sm:$0xf]
  %v107 = vld [vmem:[%s1 + $0x54] sm:$0xff]
  %v108 = vld [vmem:[%s1 + $0x5c] sm:$0xff]
  %v109 = vld [vmem:[%s1 + $0x64] sm:$0xff]
  %v110 = vld [vmem:[%s1 + $0x6c] sm:$0xf]
  %v111 = vld [vmem:[%s1 + $0x70] sm:$0xff]
  %v112 = vld [vmem:[%s1 + $0x78] sm:$0xff]
  %v113 = vld [vmem:[%s1 + $0x80] sm:$0xff]
  %v114 = vld [vmem:[%s1 + $0x88] sm:$0xf]
  %v115 = vld [vmem:[%s1 + $0x8c] sm:$0xff]
  %v116 = vld [vmem:[%s1 + $0x94] sm:$0xff]
  %v117 = vld [vmem:[%s1 + $0x9c] sm:$0xff]
  %v118 = vld [vmem:[%s1 + $0xa4] sm:$0xf]
  %v119 = vld [vmem:[%s1 + $0xa8] sm:$0xff]
  %v120 = vld [vmem:[%s1 + $0xb0] sm:$0xff]
  %v121 = vld [vmem:[%s1 + $0xb8] sm:$0xff]
  %v122 = vld [vmem:[%s1 + $0xc0] sm:$0xf]
  %v123 = vld [vmem:[%s1 + $0xc4] sm:$0xff]
  %v124 = vld [vmem:[%s1 + $0xcc] sm:$0xff]
  %v125 = vld [vmem:[%s1 + $0xd4] sm:$0xff]
  %v126 = vld [vmem:[%s1 + $0xdc] sm:$0xf]
  %v127 = vld [vmem:[%s1 + $0xe0] sm:$0xff]
  %v128 = vld [vmem:[%s1 + $0xe8] sm:$0xff]
  %v129 = vld [vmem:[%s1 + $0xf0] sm:$0xff]
  %v130 = vld [vmem:[%s1 + $0xf8] sm:$0xf]
  %v131 = vld [vmem:[%s1 + $0xfc] sm:$0xff]
  %v132 = vld [vmem:[%s1 + $0x104] sm:$0xff]
  %v133 = vld [vmem:[%s1 + $0x10c] sm:$0xff]
  %v134 = vld [vmem:[%s1 + $0x114] sm:$0xf]
  %v135 = vld [vmem:[%s1 + $0x118] sm:$0xff]
  %v136 = vld [vmem:[%s1 + $0x120] sm:$0xff]
  %v137 = vld [vmem:[%s1 + $0x128] sm:$0xff]
  %v138 = vld [vmem:[%s1 + $0x130] sm:$0xf]
  %v139 = vld [vmem:[%s1 + $0x134] sm:$0xff]
  %v140 = vld [vmem:[%s1 + $0x13c] sm:$0xff]
  %v141 = vld [vmem:[%s1 + $0x144] sm:$0xff]
  %v142 = vld [vmem:[%s1 + $0x14c] sm:$0xf]
  %v143 = vld [vmem:[%s1 + $0x150] sm:$0xff]
  %v144 = vld [vmem:[%s1 + $0x158] sm:$0xff]
  %v145 = vld [vmem:[%s1 + $0x160] sm:$0xff]
  %v146 = vld [vmem:[%s1 + $0x168] sm:$0xf]
  %v147 = vld [vmem:[%s1 + $0x16c] sm:$0xff]
  %v148 = vld [vmem:[%s1 + $0x174] sm:$0xff]
  %v149 = vld [vmem:[%s1 + $0x17c] sm:$0xff]
  %v150 = vld [vmem:[%s1 + $0x184] sm:$0xf]
  %v151 = vld [vmem:[%s1 + $0x188] sm:$0xff]
  %v152 = vld [vmem:[%s1 + $0x190] sm:$0xff]
  %v153 = vld [vmem:[%s1 + $0x198] sm:$0xff]
  %v154 = vld [vmem:[%s1 + $0x1a0] sm:$0xf]
  %v155 = vld [vmem:[%s1 + $0x1a4] sm:$0xff]
  %v156 = vld [vmem:[%s1 + $0x1ac] sm:$0xff]
  %v157 = vld [vmem:[%s1 + $0x1b4] sm:$0xff]
  %v158 = vld [vmem:[%s1 + $0x1bc] sm:$0xf]
  %v159 = vld [vmem:[%s2] sm:$0xff]
  %v160 = vld [vmem:[%s2 + $0x8] sm:$0xff]
  %v161 = vld [vmem:[%s2 + $0x10] sm:$0xff]
  %v162 = vld [vmem:[%s2 + $0x18] sm:$0xff]
  %v163 = vld [vmem:[%s2 + $0x20] sm:$0xff]
  %v164 = vld [vmem:[%s2 + $0x28] sm:$0xff]
  %v165 = vld [vmem:[%s2 + $0x30] sm:$0xff]
  %v166 = vld [vmem:[%s2 + $0x38] sm:$0xff]
  %v167 = vld [vmem:[%s2 + $0x40] sm:$0xff]
  %v168 = vld [vmem:[%s2 + $0x48] sm:$0xff]
  %v169 = vld [vmem:[%s2 + $0x50] sm:$0xff]
  %v170 = vld [vmem:[%s2 + $0x58] sm:$0xff]
  %v171 = vld [vmem:[%s2 + $0x60] sm:$0xff]
  %v172 = vld [vmem:[%s2 + $0x68] sm:$0xff]
  %v173 = vld [vmem:[%s2 + $0x70] sm:$0xff]
  %v174 = vld [vmem:[%s2 + $0x78] sm:$0xff]
  %v175 = vld [vmem:[%s2 + $0x80] sm:$0xff]
  %v176 = vld [vmem:[%s2 + $0x88] sm:$0xff]
  %v177 = vld [vmem:[%s2 + $0x90] sm:$0xff]
  %v178 = vld [vmem:[%s2 + $0x98] sm:$0xff]
  %v179 = vld [vmem:[%s2 + $0xa0] sm:$0xff]
  %v180 = vld [vmem:[%s2 + $0xa8] sm:$0xff]
  %v181 = vld [vmem:[%s2 + $0xb0] sm:$0xff]
  %v182 = vld [vmem:[%s2 + $0xb8] sm:$0xff]
  %v183 = vld [vmem:[%s2 + $0xc0] sm:$0xff]
  %v184 = vld [vmem:[%s2 + $0xc8] sm:$0xff]
  %v185 = vld [vmem:[%s2 + $0xd0] sm:$0xff]
  %v186 = vld [vmem:[%s2 + $0xd8] sm:$0xff]
  %v187 = vld [vmem:[%s2 + $0xe0] sm:$0xff]
  %v188 = vld [vmem:[%s2 + $0xe8] sm:$0xff]
  %v189 = vld [vmem:[%s2 + $0xf0] sm:$0xff]
  %v190 = vld [vmem:[%s2 + $0xf8] sm:$0xff]
  %v191 = vld [vmem:[%s2 + $0x100] sm:$0xff]
  %v192 = vld [vmem:[%s2 + $0x108] sm:$0xff]
  %v193 = vld [vmem:[%s2 + $0x110] sm:$0xff]
  %v194 = vld [vmem:[%s2 + $0x118] sm:$0xff]
  %v195 = vld [vmem:[%s2 + $0x120] sm:$0xff]
  %v196 = vld [vmem:[%s2 + $0x128] sm:$0xff]
  %v197 = vld [vmem:[%s2 + $0x130] sm:$0xff]
  %v198 = vld [vmem:[%s2 + $0x138] sm:$0xff]
  %v199 = vld [vmem:[%s2 + $0x140] sm:$0xff]
  %v200 = vld [vmem:[%s2 + $0x148] sm:$0xff]
  %v201 = vld [vmem:[%s2 + $0x150] sm:$0xff]
  %v202 = vld [vmem:[%s2 + $0x158] sm:$0xff]
  %v203 = vld [vmem:[%s2 + $0x160] sm:$0xff]
  %v204 = vld [vmem:[%s2 + $0x168] sm:$0xff]
  %v205 = vld [vmem:[%s2 + $0x170] sm:$0xff]
  %v206 = vld [vmem:[%s2 + $0x178] sm:$0xff]
  %v207 = vld [vmem:[%s2 + $0x180] sm:$0xff]
  %v208 = vld [vmem:[%s2 + $0x188] sm:$0xff]
  %v209 = vld [vmem:[%s2 + $0x190] sm:$0xff]
  %v210 = vld [vmem:[%s2 + $0x198] sm:$0xff]
  %v211 = vld [vmem:[%s2 + $0x1a0] sm:$0xff]
  %v212 = vld [vmem:[%s2 + $0x1a8] sm:$0xff]
  %v213 = vld [vmem:[%s2 + $0x1b0] sm:$0xff]
  %v214 = vld [vmem:[%s2 + $0x1b8] sm:$0xff]
  %v215 = vld [vmem:[%s2 + $0x1c0] sm:$0xff]
  %v216 = vld [vmem:[%s2 + $0x1c8] sm:$0xff]
  %v217 = vld [vmem:[%s2 + $0x1d0] sm:$0xff]
  %v218 = vld [vmem:[%s2 + $0x1d8] sm:$0xff]
  %v219 = vld [vmem:[%s2 + $0x1e0] sm:$0xff]
  %v220 = vld [vmem:[%s2 + $0x1e8] sm:$0xff]
  %v221 = vld [vmem:[%s2 + $0x1f0] sm:$0xff]
  %v222 = vld [vmem:[%s2 + $0x1f8] sm:$0xff]
  %v223 = vld [vmem:[%s2 + $0x200] sm:$0xff]
  %v224 = vld [vmem:[%s2 + $0x208] sm:$0xff]
  %v225 = vld [vmem:[%s2 + $0x210] sm:$0xff]
  %v226 = vld [vmem:[%s2 + $0x218] sm:$0xff]
  %v227 = vld [vmem:[%s2 + $0x220] sm:$0xff]
  %v228 = vld [vmem:[%s2 + $0x228] sm:$0xff]
  %v229 = vld [vmem:[%s2 + $0x230] sm:$0xff]
  %v230 = vld [vmem:[%s2 + $0x238] sm:$0xff]
  %v231 = vld [vmem:[%s2 + $0x240] sm:$0xff]
  %v232 = vld [vmem:[%s2 + $0x248] sm:$0xff]
  %v233 = vld [vmem:[%s2 + $0x250] sm:$0xff]
  %v234 = vld [vmem:[%s2 + $0x258] sm:$0xff]
  %v235 = vld [vmem:[%s2 + $0x260] sm:$0xff]
  %v236 = vld [vmem:[%s2 + $0x268] sm:$0xff]
  %v237 = vld [vmem:[%s2 + $0x270] sm:$0xff]
  %v238 = vld [vmem:[%s2 + $0x278] sm:$0xff]
  %v239 = vld [vmem:[%s2 + $0x280] sm:$0xff]
  %v240 = vld [vmem:[%s2 + $0x288] sm:$0xff]
  %v241 = vld [vmem:[%s2 + $0x290] sm:$0xff]
  %v242 = vld [vmem:[%s2 + $0x298] sm:$0xff]
  %v243 = vld [vmem:[%s2 + $0x2a0] sm:$0xff]
  %v244 = vld [vmem:[%s2 + $0x2a8] sm:$0xff]
  %v245 = vld [vmem:[%s2 + $0x2b0] sm:$0xff]
  %v246 = vld [vmem:[%s2 + $0x2b8] sm:$0xff]
  %v247 = vld [vmem:[%s2 + $0x2c0] sm:$0xff]
  %v248 = vld [vmem:[%s2 + $0x2c8] sm:$0xff]
  %v249 = vld [vmem:[%s2 + $0x2d0] sm:$0xff]
  %v250 = vld [vmem:[%s2 + $0x2d8] sm:$0xff]
  %v251 = vld [vmem:[%s2 + $0x2e0] sm:$0xff]
  %v252 = vld [vmem:[%s2 + $0x2e8] sm:$0xff]
  %v253 = vld [vmem:[%s2 + $0x2f0] sm:$0xff]
  %v254 = vld [vmem:[%s2 + $0x2f8] sm:$0xff]
  %v255 = vld [vmem:[%s2 + $0x300] sm:$0xff]
  %v256 = vld [vmem:[%s2 + $0x308] sm:$0xff]
  %v257 = vld [vmem:[%s2 + $0x310] sm:$0xff]
  %v258 = vld [vmem:[%s2 + $0x318] sm:$0xff]
  %v259 = vld [vmem:[%s2 + $0x320] sm:$0xff]
  %v260 = vld [vmem:[%s2 + $0x328] sm:$0xff]
  %v261 = vld [vmem:[%s2 + $0x330] sm:$0xff]
  %v262 = vld [vmem:[%s2 + $0x338] sm:$0xff]
  %v263 = vld [vmem:[%s2 + $0x340] sm:$0xff]
  %v264 = vld [vmem:[%s2 + $0x348] sm:$0xff]
  %v265 = vld [vmem:[%s2 + $0x350] sm:$0xff]
  %v266 = vld [vmem:[%s2 + $0x358] sm:$0xff]
  %v267 = vld [vmem:[%s2 + $0x360] sm:$0xff]
  %v268 = vld [vmem:[%s2 + $0x368] sm:$0xff]
  %v269 = vld [vmem:[%s2 + $0x370] sm:$0xff]
  %v270 = vld [vmem:[%s2 + $0x378] sm:$0xff]
  %v271 = vld [vmem:[%s6] sm:$0x3]
  %v273 = vlaneseq
  %v274 = vshrl.u32 %v273, 7
  %v275 = vsub.s32 0, %v274
  %v276 = vrot.slane %v271, %v275
  %v277 = vlaneseq
  %v278 = vshrl.u32 %v277, 7
  %v279 = vsub.s32 1, %v278
  %v280 = vrot.slane %v271, %v279
  %v347 = vunpack.c.l.b16 %v95
  %v348 = vunpack.c.h.b16 %v95
  %v349 = vunpack.c.l.b16 %v96
  %v350 = vunpack.c.h.b16 %v96
  %v351 = vunpack.c.l.b16 %v97
  %v352 = vunpack.c.h.b16 %v97
  %v353 = vunpack.c.l.b16 %v98
  %v354 = vunpack.c.l.b16 %v99
  %v355 = vunpack.c.h.b16 %v99
  %v356 = vunpack.c.l.b16 %v100
  %v357 = vunpack.c.h.b16 %v100
  %v358 = vunpack.c.l.b16 %v101
  %v359 = vunpack.c.h.b16 %v101
  %v360 = vunpack.c.l.b16 %v102
  %v361 = vunpack.c.l.b16 %v103
  %v362 = vunpack.c.h.b16 %v103
  %v363 = vunpack.c.l.b16 %v104
  %v364 = vunpack.c.h.b16 %v104
  %v365 = vunpack.c.l.b16 %v105
  %v366 = vunpack.c.h.b16 %v105
  %v367 = vunpack.c.l.b16 %v106
  %v368 = vunpack.c.l.b16 %v107
  %v369 = vunpack.c.h.b16 %v107
  %v370 = vunpack.c.l.b16 %v108
  %v371 = vunpack.c.h.b16 %v108
  %v372 = vunpack.c.l.b16 %v109
  %v373 = vunpack.c.h.b16 %v109
  %v374 = vunpack.c.l.b16 %v110
  %v375 = vunpack.c.l.b16 %v111
  %v376 = vunpack.c.h.b16 %v111
  %v377 = vunpack.c.l.b16 %v112
  %v378 = vunpack.c.h.b16 %v112
  %v379 = vunpack.c.l.b16 %v113
  %v380 = vunpack.c.h.b16 %v113
  %v381 = vunpack.c.l.b16 %v114
  %v382 = vunpack.c.l.b16 %v115
  %v383 = vunpack.c.h.b16 %v115
  %v384 = vunpack.c.l.b16 %v116
  %v385 = vunpack.c.h.b16 %v116
  %v386 = vunpack.c.l.b16 %v117
  %v387 = vunpack.c.h.b16 %v117
  %v388 = vunpack.c.l.b16 %v118
  %v389 = vunpack.c.l.b16 %v119
  %v390 = vunpack.c.h.b16 %v119
  %v391 = vunpack.c.l.b16 %v120
  %v392 = vunpack.c.h.b16 %v120
  %v393 = vunpack.c.l.b16 %v121
  %v394 = vunpack.c.h.b16 %v121
  %v395 = vunpack.c.l.b16 %v122
  %v396 = vunpack.c.l.b16 %v123
  %v397 = vunpack.c.h.b16 %v123
  %v398 = vunpack.c.l.b16 %v124
  %v399 = vunpack.c.h.b16 %v124
  %v400 = vunpack.c.l.b16 %v125
  %v401 = vunpack.c.h.b16 %v125
  %v402 = vunpack.c.l.b16 %v126
  %v403 = vunpack.c.l.b16 %v127
  %v404 = vunpack.c.h.b16 %v127
  %v405 = vunpack.c.l.b16 %v128
  %v406 = vunpack.c.h.b16 %v128
  %v407 = vunpack.c.l.b16 %v129
  %v408 = vunpack.c.h.b16 %v129
  %v409 = vunpack.c.l.b16 %v130
  %v410 = vunpack.c.l.b16 %v131
  %v411 = vunpack.c.h.b16 %v131
  %v412 = vunpack.c.l.b16 %v132
  %v413 = vunpack.c.h.b16 %v132
  %v414 = vunpack.c.l.b16 %v133
  %v415 = vunpack.c.h.b16 %v133
  %v416 = vunpack.c.l.b16 %v134
  %v417 = vunpack.c.l.b16 %v135
  %v418 = vunpack.c.h.b16 %v135
  %v419 = vunpack.c.l.b16 %v136
  %v420 = vunpack.c.h.b16 %v136
  %v421 = vunpack.c.l.b16 %v137
  %v422 = vunpack.c.h.b16 %v137
  %v423 = vunpack.c.l.b16 %v138
  %v424 = vunpack.c.l.b16 %v139
  %v425 = vunpack.c.h.b16 %v139
  %v426 = vunpack.c.l.b16 %v140
  %v427 = vunpack.c.h.b16 %v140
  %v428 = vunpack.c.l.b16 %v141
  %v429 = vunpack.c.h.b16 %v141
  %v430 = vunpack.c.l.b16 %v142
  %v431 = vunpack.c.l.b16 %v143
  %v432 = vunpack.c.h.b16 %v143
  %v433 = vunpack.c.l.b16 %v144
  %v434 = vunpack.c.h.b16 %v144
  %v435 = vunpack.c.l.b16 %v145
  %v436 = vunpack.c.h.b16 %v145
  %v437 = vunpack.c.l.b16 %v146
  %v438 = vunpack.c.l.b16 %v147
  %v439 = vunpack.c.h.b16 %v147
  %v440 = vunpack.c.l.b16 %v148
  %v441 = vunpack.c.h.b16 %v148
  %v442 = vunpack.c.l.b16 %v149
  %v443 = vunpack.c.h.b16 %v149
  %v444 = vunpack.c.l.b16 %v150
  %v445 = vunpack.c.l.b16 %v151
  %v446 = vunpack.c.h.b16 %v151
  %v447 = vunpack.c.l.b16 %v152
  %v448 = vunpack.c.h.b16 %v152
  %v449 = vunpack.c.l.b16 %v153
  %v450 = vunpack.c.h.b16 %v153
  %v451 = vunpack.c.l.b16 %v154
  %v452 = vunpack.c.l.b16 %v155
  %v453 = vunpack.c.h.b16 %v155
  %v454 = vunpack.c.l.b16 %v156
  %v455 = vunpack.c.h.b16 %v156
  %v456 = vunpack.c.l.b16 %v157
  %v457 = vunpack.c.h.b16 %v157
  %v458 = vunpack.c.l.b16 %v158
  %v459 = vpack.c.b16 %v354, %v347
  %v460 = vpack.c.b16 %v355, %v348
  %v461 = vpack.c.b16 %v356, %v349
  %v462 = vpack.c.b16 %v357, %v350
  %v463 = vpack.c.b16 %v358, %v351
  %v464 = vpack.c.b16 %v359, %v352
  %v465 = vpack.c.b16 %v360, %v353
  %v466 = vpack.c.b16 %v368, %v361
  %v467 = vpack.c.b16 %v369, %v362
  %v468 = vpack.c.b16 %v370, %v363
  %v469 = vpack.c.b16 %v371, %v364
  %v470 = vpack.c.b16 %v372, %v365
  %v471 = vpack.c.b16 %v373, %v366
  %v472 = vpack.c.b16 %v374, %v367
  %v473 = vpack.c.b16 %v382, %v375
  %v474 = vpack.c.b16 %v383, %v376
  %v475 = vpack.c.b16 %v384, %v377
  %v476 = vpack.c.b16 %v385, %v378
  %v477 = vpack.c.b16 %v386, %v379
  %v478 = vpack.c.b16 %v387, %v380
  %v479 = vpack.c.b16 %v388, %v381
  %v480 = vpack.c.b16 %v396, %v389
  %v481 = vpack.c.b16 %v397, %v390
  %v482 = vpack.c.b16 %v398, %v391
  %v483 = vpack.c.b16 %v399, %v392
  %v484 = vpack.c.b16 %v400, %v393
  %v485 = vpack.c.b16 %v401, %v394
  %v486 = vpack.c.b16 %v402, %v395
  %v487 = vpack.c.b16 %v410, %v403
  %v488 = vpack.c.b16 %v411, %v404
  %v489 = vpack.c.b16 %v412, %v405
  %v490 = vpack.c.b16 %v413, %v406
  %v491 = vpack.c.b16 %v414, %v407
  %v492 = vpack.c.b16 %v415, %v408
  %v493 = vpack.c.b16 %v416, %v409
  %v494 = vpack.c.b16 %v424, %v417
  %v495 = vpack.c.b16 %v425, %v418
  %v496 = vpack.c.b16 %v426, %v419
  %v497 = vpack.c.b16 %v427, %v420
  %v498 = vpack.c.b16 %v428, %v421
  %v499 = vpack.c.b16 %v429, %v422
  %v500 = vpack.c.b16 %v430, %v423
  %v501 = vpack.c.b16 %v438, %v431
  %v502 = vpack.c.b16 %v439, %v432
  %v503 = vpack.c.b16 %v440, %v433
  %v504 = vpack.c.b16 %v441, %v434
  %v505 = vpack.c.b16 %v442, %v435
  %v506 = vpack.c.b16 %v443, %v436
  %v507 = vpack.c.b16 %v444, %v437
  %v508 = vpack.c.b16 %v452, %v445
  %v509 = vpack.c.b16 %v453, %v446
  %v510 = vpack.c.b16 %v454, %v447
  %v511 = vpack.c.b16 %v455, %v448
  %v512 = vpack.c.b16 %v456, %v449
  %v513 = vpack.c.b16 %v457, %v450
  %v514 = vpack.c.b16 %v458, %v451
  %v683 = vunpack.c.l.b16 %v159
  %v684 = vunpack.c.h.b16 %v159
  %v685 = vunpack.c.l.b16 %v160
  %v686 = vunpack.c.h.b16 %v160
  %v687 = vunpack.c.l.b16 %v161
  %v688 = vunpack.c.h.b16 %v161
  %v689 = vunpack.c.l.b16 %v162
  %v690 = vunpack.c.h.b16 %v162
  %v691 = vunpack.c.l.b16 %v163
  %v692 = vunpack.c.h.b16 %v163
  %v693 = vunpack.c.l.b16 %v164
  %v694 = vunpack.c.h.b16 %v164
  %v695 = vunpack.c.l.b16 %v165
  %v696 = vunpack.c.h.b16 %v165
  %v697 = vunpack.c.l.b16 %v166
  %v698 = vunpack.c.h.b16 %v166
  %v699 = vunpack.c.l.b16 %v167
  %v700 = vunpack.c.h.b16 %v167
  %v701 = vunpack.c.l.b16 %v168
  %v702 = vunpack.c.h.b16 %v168
  %v703 = vunpack.c.l.b16 %v169
  %v704 = vunpack.c.h.b16 %v169
  %v705 = vunpack.c.l.b16 %v170
  %v706 = vunpack.c.h.b16 %v170
  %v707 = vunpack.c.l.b16 %v171
  %v708 = vunpack.c.h.b16 %v171
  %v709 = vunpack.c.l.b16 %v172
  %v710 = vunpack.c.h.b16 %v172
  %v711 = vunpack.c.l.b16 %v173
  %v712 = vunpack.c.h.b16 %v173
  %v713 = vunpack.c.l.b16 %v174
  %v714 = vunpack.c.h.b16 %v174
  %v715 = vunpack.c.l.b16 %v175
  %v716 = vunpack.c.h.b16 %v175
  %v717 = vunpack.c.l.b16 %v176
  %v718 = vunpack.c.h.b16 %v176
  %v719 = vunpack.c.l.b16 %v177
  %v720 = vunpack.c.h.b16 %v177
  %v721 = vunpack.c.l.b16 %v178
  %v722 = vunpack.c.h.b16 %v178
  %v723 = vunpack.c.l.b16 %v179
  %v724 = vunpack.c.h.b16 %v179
  %v725 = vunpack.c.l.b16 %v180
  %v726 = vunpack.c.h.b16 %v180
  %v727 = vunpack.c.l.b16 %v181
  %v728 = vunpack.c.h.b16 %v181
  %v729 = vunpack.c.l.b16 %v182
  %v730 = vunpack.c.h.b16 %v182
  %v731 = vunpack.c.l.b16 %v183
  %v732 = vunpack.c.h.b16 %v183
  %v733 = vunpack.c.l.b16 %v184
  %v734 = vunpack.c.h.b16 %v184
  %v735 = vunpack.c.l.b16 %v185
  %v736 = vunpack.c.h.b16 %v185
  %v737 = vunpack.c.l.b16 %v186
  %v738 = vunpack.c.h.b16 %v186
  %v739 = vunpack.c.l.b16 %v187
  %v740 = vunpack.c.h.b16 %v187
  %v741 = vunpack.c.l.b16 %v188
  %v742 = vunpack.c.h.b16 %v188
  %v743 = vunpack.c.l.b16 %v189
  %v744 = vunpack.c.h.b16 %v189
  %v745 = vunpack.c.l.b16 %v190
  %v746 = vunpack.c.h.b16 %v190
  %v747 = vunpack.c.l.b16 %v191
  %v748 = vunpack.c.h.b16 %v191
  %v749 = vunpack.c.l.b16 %v192
  %v750 = vunpack.c.h.b16 %v192
  %v751 = vunpack.c.l.b16 %v193
  %v752 = vunpack.c.h.b16 %v193
  %v753 = vunpack.c.l.b16 %v194
  %v754 = vunpack.c.h.b16 %v194
  %v755 = vunpack.c.l.b16 %v195
  %v756 = vunpack.c.h.b16 %v195
  %v757 = vunpack.c.l.b16 %v196
  %v758 = vunpack.c.h.b16 %v196
  %v759 = vunpack.c.l.b16 %v197
  %v760 = vunpack.c.h.b16 %v197
  %v761 = vunpack.c.l.b16 %v198
  %v762 = vunpack.c.h.b16 %v198
  %v763 = vunpack.c.l.b16 %v199
  %v764 = vunpack.c.h.b16 %v199
  %v765 = vunpack.c.l.b16 %v200
  %v766 = vunpack.c.h.b16 %v200
  %v767 = vunpack.c.l.b16 %v201
  %v768 = vunpack.c.h.b16 %v201
  %v769 = vunpack.c.l.b16 %v202
  %v770 = vunpack.c.h.b16 %v202
  %v771 = vunpack.c.l.b16 %v203
  %v772 = vunpack.c.h.b16 %v203
  %v773 = vunpack.c.l.b16 %v204
  %v774 = vunpack.c.h.b16 %v204
  %v775 = vunpack.c.l.b16 %v205
  %v776 = vunpack.c.h.b16 %v205
  %v777 = vunpack.c.l.b16 %v206
  %v778 = vunpack.c.h.b16 %v206
  %v779 = vunpack.c.l.b16 %v207
  %v780 = vunpack.c.h.b16 %v207
  %v781 = vunpack.c.l.b16 %v208
  %v782 = vunpack.c.h.b16 %v208
  %v783 = vunpack.c.l.b16 %v209
  %v784 = vunpack.c.h.b16 %v209
  %v785 = vunpack.c.l.b16 %v210
  %v786 = vunpack.c.h.b16 %v210
  %v787 = vunpack.c.l.b16 %v211
  %v788 = vunpack.c.h.b16 %v211
  %v789 = vunpack.c.l.b16 %v212
  %v790 = vunpack.c.h.b16 %v212
  %v791 = vunpack.c.l.b16 %v213
  %v792 = vunpack.c.h.b16 %v213
  %v793 = vunpack.c.l.b16 %v214
  %v794 = vunpack.c.h.b16 %v214
  %v795 = vunpack.c.l.b16 %v215
  %v796 = vunpack.c.h.b16 %v215
  %v797 = vunpack.c.l.b16 %v216
  %v798 = vunpack.c.h.b16 %v216
  %v799 = vunpack.c.l.b16 %v217
  %v800 = vunpack.c.h.b16 %v217
  %v801 = vunpack.c.l.b16 %v218
  %v802 = vunpack.c.h.b16 %v218
  %v803 = vunpack.c.l.b16 %v219
  %v804 = vunpack.c.h.b16 %v219
  %v805 = vunpack.c.l.b16 %v220
  %v806 = vunpack.c.h.b16 %v220
  %v807 = vunpack.c.l.b16 %v221
  %v808 = vunpack.c.h.b16 %v221
  %v809 = vunpack.c.l.b16 %v222
  %v810 = vunpack.c.h.b16 %v222
  %v811 = vunpack.c.l.b16 %v223
  %v812 = vunpack.c.h.b16 %v223
  %v813 = vunpack.c.l.b16 %v224
  %v814 = vunpack.c.h.b16 %v224
  %v815 = vunpack.c.l.b16 %v225
  %v816 = vunpack.c.h.b16 %v225
  %v817 = vunpack.c.l.b16 %v226
  %v818 = vunpack.c.h.b16 %v226
  %v819 = vunpack.c.l.b16 %v227
  %v820 = vunpack.c.h.b16 %v227
  %v821 = vunpack.c.l.b16 %v228
  %v822 = vunpack.c.h.b16 %v228
  %v823 = vunpack.c.l.b16 %v229
  %v824 = vunpack.c.h.b16 %v229
  %v825 = vunpack.c.l.b16 %v230
  %v826 = vunpack.c.h.b16 %v230
  %v827 = vunpack.c.l.b16 %v231
  %v828 = vunpack.c.h.b16 %v231
  %v829 = vunpack.c.l.b16 %v232
  %v830 = vunpack.c.h.b16 %v232
  %v831 = vunpack.c.l.b16 %v233
  %v832 = vunpack.c.h.b16 %v233
  %v833 = vunpack.c.l.b16 %v234
  %v834 = vunpack.c.h.b16 %v234
  %v835 = vunpack.c.l.b16 %v235
  %v836 = vunpack.c.h.b16 %v235
  %v837 = vunpack.c.l.b16 %v236
  %v838 = vunpack.c.h.b16 %v236
  %v839 = vunpack.c.l.b16 %v237
  %v840 = vunpack.c.h.b16 %v237
  %v841 = vunpack.c.l.b16 %v238
  %v842 = vunpack.c.h.b16 %v238
  %v843 = vunpack.c.l.b16 %v239
  %v844 = vunpack.c.h.b16 %v239
  %v845 = vunpack.c.l.b16 %v240
  %v846 = vunpack.c.h.b16 %v240
  %v847 = vunpack.c.l.b16 %v241
  %v848 = vunpack.c.h.b16 %v241
  %v849 = vunpack.c.l.b16 %v242
  %v850 = vunpack.c.h.b16 %v242
  %v851 = vunpack.c.l.b16 %v243
  %v852 = vunpack.c.h.b16 %v243
  %v853 = vunpack.c.l.b16 %v244
  %v854 = vunpack.c.h.b16 %v244
  %v855 = vunpack.c.l.b16 %v245
  %v856 = vunpack.c.h.b16 %v245
  %v857 = vunpack.c.l.b16 %v246
  %v858 = vunpack.c.h.b16 %v246
  %v859 = vunpack.c.l.b16 %v247
  %v860 = vunpack.c.h.b16 %v247
  %v861 = vunpack.c.l.b16 %v248
  %v862 = vunpack.c.h.b16 %v248
  %v863 = vunpack.c.l.b16 %v249
  %v864 = vunpack.c.h.b16 %v249
  %v865 = vunpack.c.l.b16 %v250
  %v866 = vunpack.c.h.b16 %v250
  %v867 = vunpack.c.l.b16 %v251
  %v868 = vunpack.c.h.b16 %v251
  %v869 = vunpack.c.l.b16 %v252
  %v870 = vunpack.c.h.b16 %v252
  %v871 = vunpack.c.l.b16 %v253
  %v872 = vunpack.c.h.b16 %v253
  %v873 = vunpack.c.l.b16 %v254
  %v874 = vunpack.c.h.b16 %v254
  %v875 = vunpack.c.l.b16 %v255
  %v876 = vunpack.c.h.b16 %v255
  %v877 = vunpack.c.l.b16 %v256
  %v878 = vunpack.c.h.b16 %v256
  %v879 = vunpack.c.l.b16 %v257
  %v880 = vunpack.c.h.b16 %v257
  %v881 = vunpack.c.l.b16 %v258
  %v882 = vunpack.c.h.b16 %v258
  %v883 = vunpack.c.l.b16 %v259
  %v884 = vunpack.c.h.b16 %v259
  %v885 = vunpack.c.l.b16 %v260
  %v886 = vunpack.c.h.b16 %v260
  %v887 = vunpack.c.l.b16 %v261
  %v888 = vunpack.c.h.b16 %v261
  %v889 = vunpack.c.l.b16 %v262
  %v890 = vunpack.c.h.b16 %v262
  %v891 = vunpack.c.l.b16 %v263
  %v892 = vunpack.c.h.b16 %v263
  %v893 = vunpack.c.l.b16 %v264
  %v894 = vunpack.c.h.b16 %v264
  %v895 = vunpack.c.l.b16 %v265
  %v896 = vunpack.c.h.b16 %v265
  %v897 = vunpack.c.l.b16 %v266
  %v898 = vunpack.c.h.b16 %v266
  %v899 = vunpack.c.l.b16 %v267
  %v900 = vunpack.c.h.b16 %v267
  %v901 = vunpack.c.l.b16 %v268
  %v902 = vunpack.c.h.b16 %v268
  %v903 = vunpack.c.l.b16 %v269
  %v904 = vunpack.c.h.b16 %v269
  %v905 = vunpack.c.l.b16 %v270
  %v906 = vunpack.c.h.b16 %v270
  %v907 = vpack.c.b16 %v685, %v683
  %v908 = vpack.c.b16 %v686, %v684
  %v909 = vpack.c.b16 %v689, %v687
  %v910 = vpack.c.b16 %v690, %v688
  %v911 = vpack.c.b16 %v693, %v691
  %v912 = vpack.c.b16 %v694, %v692
  %v913 = vpack.c.b16 %v697, %v695
  %v914 = vpack.c.b16 %v698, %v696
  %v915 = vpack.c.b16 %v701, %v699
  %v916 = vpack.c.b16 %v702, %v700
  %v917 = vpack.c.b16 %v705, %v703
  %v918 = vpack.c.b16 %v706, %v704
  %v919 = vpack.c.b16 %v709, %v707
  %v920 = vpack.c.b16 %v710, %v708
  %v921 = vpack.c.b16 %v713, %v711
  %v922 = vpack.c.b16 %v714, %v712
  %v923 = vpack.c.b16 %v717, %v715
  %v924 = vpack.c.b16 %v718, %v716
  %v925 = vpack.c.b16 %v721, %v719
  %v926 = vpack.c.b16 %v722, %v720
  %v927 = vpack.c.b16 %v725, %v723
  %v928 = vpack.c.b16 %v726, %v724
  %v929 = vpack.c.b16 %v729, %v727
  %v930 = vpack.c.b16 %v730, %v728
  %v931 = vpack.c.b16 %v733, %v731
  %v932 = vpack.c.b16 %v734, %v732
  %v933 = vpack.c.b16 %v737, %v735
  %v934 = vpack.c.b16 %v738, %v736
  %v935 = vpack.c.b16 %v741, %v739
  %v936 = vpack.c.b16 %v742, %v740
  %v937 = vpack.c.b16 %v745, %v743
  %v938 = vpack.c.b16 %v746, %v744
  %v939 = vpack.c.b16 %v749, %v747
  %v940 = vpack.c.b16 %v750, %v748
  %v941 = vpack.c.b16 %v753, %v751
  %v942 = vpack.c.b16 %v754, %v752
  %v943 = vpack.c.b16 %v757, %v755
  %v944 = vpack.c.b16 %v758, %v756
  %v945 = vpack.c.b16 %v761, %v759
  %v946 = vpack.c.b16 %v762, %v760
  %v947 = vpack.c.b16 %v765, %v763
  %v948 = vpack.c.b16 %v766, %v764
  %v949 = vpack.c.b16 %v769, %v767
  %v950 = vpack.c.b16 %v770, %v768
  %v951 = vpack.c.b16 %v773, %v771
  %v952 = vpack.c.b16 %v774, %v772
  %v953 = vpack.c.b16 %v777, %v775
  %v954 = vpack.c.b16 %v778, %v776
  %v955 = vpack.c.b16 %v781, %v779
  %v956 = vpack.c.b16 %v782, %v780
  %v957 = vpack.c.b16 %v785, %v783
  %v958 = vpack.c.b16 %v786, %v784
  %v959 = vpack.c.b16 %v789, %v787
  %v960 = vpack.c.b16 %v790, %v788
  %v961 = vpack.c.b16 %v793, %v791
  %v962 = vpack.c.b16 %v794, %v792
  %v963 = vpack.c.b16 %v797, %v795
  %v964 = vpack.c.b16 %v798, %v796
  %v965 = vpack.c.b16 %v801, %v799
  %v966 = vpack.c.b16 %v802, %v800
  %v967 = vpack.c.b16 %v805, %v803
  %v968 = vpack.c.b16 %v806, %v804
  %v969 = vpack.c.b16 %v809, %v807
  %v970 = vpack.c.b16 %v810, %v808
  %v971 = vpack.c.b16 %v813, %v811
  %v972 = vpack.c.b16 %v814, %v812
  %v973 = vpack.c.b16 %v817, %v815
  %v974 = vpack.c.b16 %v818, %v816
  %v975 = vpack.c.b16 %v821, %v819
  %v976 = vpack.c.b16 %v822, %v820
  %v977 = vpack.c.b16 %v825, %v823
  %v978 = vpack.c.b16 %v826, %v824
  %v979 = vpack.c.b16 %v829, %v827
  %v980 = vpack.c.b16 %v830, %v828
  %v981 = vpack.c.b16 %v833, %v831
  %v982 = vpack.c.b16 %v834, %v832
  %v983 = vpack.c.b16 %v837, %v835
  %v984 = vpack.c.b16 %v838, %v836
  %v985 = vpack.c.b16 %v841, %v839
  %v986 = vpack.c.b16 %v842, %v840
  %v987 = vpack.c.b16 %v845, %v843
  %v988 = vpack.c.b16 %v846, %v844
  %v989 = vpack.c.b16 %v849, %v847
  %v990 = vpack.c.b16 %v850, %v848
  %v991 = vpack.c.b16 %v853, %v851
  %v992 = vpack.c.b16 %v854, %v852
  %v993 = vpack.c.b16 %v857, %v855
  %v994 = vpack.c.b16 %v858, %v856
  %v995 = vpack.c.b16 %v861, %v859
  %v996 = vpack.c.b16 %v862, %v860
  %v997 = vpack.c.b16 %v865, %v863
  %v998 = vpack.c.b16 %v866, %v864
  %v999 = vpack.c.b16 %v869, %v867
  %v1000 = vpack.c.b16 %v870, %v868
  %v1001 = vpack.c.b16 %v873, %v871
  %v1002 = vpack.c.b16 %v874, %v872
  %v1003 = vpack.c.b16 %v877, %v875
  %v1004 = vpack.c.b16 %v878, %v876
  %v1005 = vpack.c.b16 %v881, %v879
  %v1006 = vpack.c.b16 %v882, %v880
  %v1007 = vpack.c.b16 %v885, %v883
  %v1008 = vpack.c.b16 %v886, %v884
  %v1009 = vpack.c.b16 %v889, %v887
  %v1010 = vpack.c.b16 %v890, %v888
  %v1011 = vpack.c.b16 %v893, %v891
  %v1012 = vpack.c.b16 %v894, %v892
  %v1013 = vpack.c.b16 %v897, %v895
  %v1014 = vpack.c.b16 %v898, %v896
  %v1015 = vpack.c.b16 %v901, %v899
  %v1016 = vpack.c.b16 %v902, %v900
  %v1017 = vpack.c.b16 %v905, %v903
  %v1018 = vpack.c.b16 %v906, %v904
  %1131 = vmatprep.subr.bf16.mxu0 %v908
  %1132 = vmatpush1.bf16.msra.mxu0 %v907
  %1133 = vmatprep.subr.bf16.mxu0 %v910
  %1134 = vmatpush1.bf16.msra.mxu0 %v909
  %1135 = vmatprep.subr.bf16.mxu0 %v912
  %1136 = vmatpush1.bf16.msra.mxu0 %v911
  %1137 = vmatprep.subr.bf16.mxu0 %v914
  %1138 = vmatpush1.bf16.msra.mxu0 %v913
  %1139 = vmatprep.subr.bf16.mxu0 %v916
  %1140 = vmatpush1.bf16.msra.mxu0 %v915
  %1141 = vmatprep.subr.bf16.mxu0 %v918
  %1142 = vmatpush1.bf16.msra.mxu0 %v917
  %1143 = vmatprep.subr.bf16.mxu0 %v920
  %1144 = vmatpush1.bf16.msra.mxu0 %v919
  %1145 = vmatprep.subr.bf16.mxu0 %v922
  %1146 = vmatpush1.bf16.msra.mxu0 %v921
  %1147 = vmatprep.subr.bf16.mxu0 %v924
  %1148 = vmatpush1.bf16.msra.mxu0 %v923
  %1149 = vmatprep.subr.bf16.mxu0 %v926
  %1150 = vmatpush1.bf16.msra.mxu0 %v925
  %1151 = vmatprep.subr.bf16.mxu0 %v928
  %1152 = vmatpush1.bf16.msra.mxu0 %v927
  %1153 = vmatprep.subr.bf16.mxu0 %v930
  %1154 = vmatpush1.bf16.msra.mxu0 %v929
  %1155 = vmatprep.subr.bf16.mxu0 %v932
  %1156 = vmatpush1.bf16.msra.mxu0 %v931
  %1157 = vmatprep.subr.bf16.mxu0 %v934
  %1158 = vmatpush1.bf16.msra.mxu0 %v933
  %1159 = vmatprep.subr.bf16.mxu0 %v936
  %1160 = vmatpush1.bf16.msra.mxu0 %v935
  %1161 = vmatprep.subr.bf16.mxu0 %v938
  %1162 = vmatpush1.bf16.msra.mxu0 %v937
  %1163 = vmatprep.mubr.bf16.mxu0 %v460
  %1164 = vmatmul.mubr.bf16.gmra.mrb[0].mxu0 %v459
  %v1165 = vpop.f32.mrb[0].mxu0
  %v1166 = vadd.f32 %v276, %v1165
  %v1167 = vpop.f32.mrb[0].mxu0
  %v1168 = vadd.f32 %v280, %v1167
  %v1169 = vpop.f32.mrb[0].mxu0
  %v1170 = vadd.f32 %v276, %v1169
  %v1171 = vpop.f32.mrb[0].mxu0
  %v1172 = vadd.f32 %v280, %v1171
  %1173 = vmatprep.mubr.bf16.mxu0 %v467
  %1174 = vmatmul.mubr.bf16.gmra.mrb[0].mxu0 %v466
  %v1175 = vpop.f32.mrb[0].mxu0
  %v1176 = vadd.f32 %v276, %v1175
  %v1177 = vpop.f32.mrb[0].mxu0
  %v1178 = vadd.f32 %v280, %v1177
  %v1179 = vpop.f32.mrb[0].mxu0
  %v1180 = vadd.f32 %v276, %v1179
  %v1181 = vpop.f32.mrb[0].mxu0
  %v1182 = vadd.f32 %v280, %v1181
  %1183 = vmatprep.mubr.bf16.mxu0 %v474
  %1184 = vmatmul.mubr.bf16.gmra.mrb[0].mxu0 %v473
  %v1185 = vpop.f32.mrb[0].mxu0
  %v1186 = vadd.f32 %v276, %v1185
  %v1187 = vpop.f32.mrb[0].mxu0
  %v1188 = vadd.f32 %v280, %v1187
  %v1189 = vpop.f32.mrb[0].mxu0
  %v1190 = vadd.f32 %v276, %v1189
  %v1191 = vpop.f32.mrb[0].mxu0
  %v1192 = vadd.f32 %v280, %v1191
  %1193 = vmatprep.mubr.bf16.mxu0 %v481
  %1194 = vmatmul.mubr.bf16.gmra.mrb[0].mxu0 %v480
  %v1195 = vpop.f32.mrb[0].mxu0
  %v1196 = vadd.f32 %v276, %v1195
  %v1197 = vpop.f32.mrb[0].mxu0
  %v1198 = vadd.f32 %v280, %v1197
  %v1199 = vpop.f32.mrb[0].mxu0
  %v1200 = vadd.f32 %v276, %v1199
  %v1201 = vpop.f32.mrb[0].mxu0
  %v1202 = vadd.f32 %v280, %v1201
  %1203 = vmatprep.mubr.bf16.mxu0 %v488
  %1204 = vmatmul.mubr.bf16.gmra.mrb[0].mxu0 %v487
  %v1205 = vpop.f32.mrb[0].mxu0
  %v1206 = vadd.f32 %v276, %v1205
  %v1207 = vpop.f32.mrb[0].mxu0
  %v1208 = vadd.f32 %v280, %v1207
  %v1209 = vpop.f32.mrb[0].mxu0
  %v1210 = vadd.f32 %v276, %v1209
  %v1211 = vpop.f32.mrb[0].mxu0
  %v1212 = vadd.f32 %v280, %v1211
  %1213 = vmatprep.mubr.bf16.mxu0 %v495
  %1214 = vmatmul.mubr.bf16.gmra.mrb[0].mxu0 %v494
  %v1215 = vpop.f32.mrb[0].mxu0
  %v1216 = vadd.f32 %v276, %v1215
  %v1217 = vpop.f32.mrb[0].mxu0
  %v1218 = vadd.f32 %v280, %v1217
  %v1219 = vpop.f32.mrb[0].mxu0
  %v1220 = vadd.f32 %v276, %v1219
  %v1221 = vpop.f32.mrb[0].mxu0
  %v1222 = vadd.f32 %v280, %v1221
  %1223 = vmatprep.mubr.bf16.mxu0 %v502
  %1224 = vmatmul.mubr.bf16.gmra.mrb[0].mxu0 %v501
  %v1225 = vpop.f32.mrb[0].mxu0
  %v1226 = vadd.f32 %v276, %v1225
  %v1227 = vpop.f32.mrb[0].mxu0
  %v1228 = vadd.f32 %v280, %v1227
  %v1229 = vpop.f32.mrb[0].mxu0
  %v1230 = vadd.f32 %v276, %v1229
  %v1231 = vpop.f32.mrb[0].mxu0
  %v1232 = vadd.f32 %v280, %v1231
  %1233 = vmatprep.mubr.bf16.mxu0 %v509
  %1234 = vmatmul.mubr.bf16.gmra.mrb[0].mxu0 %v508
  %v1235 = vpop.f32.mrb[0].mxu0
  %v1236 = vadd.f32 %v276, %v1235
  %v1237 = vpop.f32.mrb[0].mxu0
  %v1238 = vadd.f32 %v280, %v1237
  %v1239 = vpop.f32.mrb[0].mxu0
  %v1240 = vadd.f32 %v276, %v1239
  %v1241 = vpop.f32.mrb[0].mxu0
  %v1242 = vadd.f32 %v280, %v1241
  %1243 = vdwg.mxu0
  %1244 = vmatprep.subr.bf16.mxu0 %v940
  %1245 = vmatpush1.bf16.msra.mxu0 %v939
  %1246 = vmatprep.subr.bf16.mxu0 %v942
  %1247 = vmatpush1.bf16.msra.mxu0 %v941
  %1248 = vmatprep.subr.bf16.mxu0 %v944
  %1249 = vmatpush1.bf16.msra.mxu0 %v943
  %1250 = vmatprep.subr.bf16.mxu0 %v946
  %1251 = vmatpush1.bf16.msra.mxu0 %v945
  %1252 = vmatprep.subr.bf16.mxu0 %v948
  %1253 = vmatpush1.bf16.msra.mxu0 %v947
  %1254 = vmatprep.subr.bf16.mxu0 %v950
  %1255 = vmatpush1.bf16.msra.mxu0 %v949
  %1256 = vmatprep.subr.bf16.mxu0 %v952
  %1257 = vmatpush1.bf16.msra.mxu0 %v951
  %1258 = vmatprep.subr.bf16.mxu0 %v954
  %1259 = vmatpush1.bf16.msra.mxu0 %v953
  %1260 = vmatprep.subr.bf16.mxu0 %v956
  %1261 = vmatpush1.bf16.msra.mxu0 %v955
  %1262 = vmatprep.subr.bf16.mxu0 %v958
  %1263 = vmatpush1.bf16.msra.mxu0 %v957
  %1264 = vmatprep.subr.bf16.mxu0 %v960
  %1265 = vmatpush1.bf16.msra.mxu0 %v959
  %1266 = vmatprep.subr.bf16.mxu0 %v962
  %1267 = vmatpush1.bf16.msra.mxu0 %v961
  %1268 = vmatprep.subr.bf16.mxu0 %v964
  %1269 = vmatpush1.bf16.msra.mxu0 %v963
  %1270 = vmatprep.subr.bf16.mxu0 %v966
  %1271 = vmatpush1.bf16.msra.mxu0 %v965
  %1272 = vmatprep.subr.bf16.mxu0 %v968
  %1273 = vmatpush1.bf16.msra.mxu0 %v967
  %1274 = vmatprep.subr.bf16.mxu0 %v970
  %1275 = vmatpush1.bf16.msra.mxu0 %v969
  %1276 = vmatprep.mubr.bf16.mxu0 %v462
  %1277 = vmatmul.mubr.bf16.gmra.mrb[0].mxu0 %v461
  %v1278 = vpop.f32.mrb[0].mxu0
  %v1279 = vadd.f32 %v1166, %v1278
  %v1280 = vpop.f32.mrb[0].mxu0
  %v1281 = vadd.f32 %v1168, %v1280
  %v1282 = vpop.f32.mrb[0].mxu0
  %v1283 = vadd.f32 %v1170, %v1282
  %v1284 = vpop.f32.mrb[0].mxu0
  %v1285 = vadd.f32 %v1172, %v1284
  %1286 = vmatprep.mubr.bf16.mxu0 %v469
  %1287 = vmatmul.mubr.bf16.gmra.mrb[0].mxu0 %v468
  %v1288 = vpop.f32.mrb[0].mxu0
  %v1289 = vadd.f32 %v1176, %v1288
  %v1290 = vpop.f32.mrb[0].mxu0
  %v1291 = vadd.f32 %v1178, %v1290
  %v1292 = vpop.f32.mrb[0].mxu0
  %v1293 = vadd.f32 %v1180, %v1292
  %v1294 = vpop.f32.mrb[0].mxu0
  %v1295 = vadd.f32 %v1182, %v1294
  %1296 = vmatprep.mubr.bf16.mxu0 %v476
  %1297 = vmatmul.mubr.bf16.gmra.mrb[0].mxu0 %v475
  %v1298 = vpop.f32.mrb[0].mxu0
  %v1299 = vadd.f32 %v1186, %v1298
  %v1300 = vpop.f32.mrb[0].mxu0
  %v1301 = vadd.f32 %v1188, %v1300
  %v1302 = vpop.f32.mrb[0].mxu0
  %v1303 = vadd.f32 %v1190, %v1302
  %v1304 = vpop.f32.mrb[0].mxu0
  %v1305 = vadd.f32 %v1192, %v1304
  %1306 = vmatprep.mubr.bf16.mxu0 %v483
  %1307 = vmatmul.mubr.bf16.gmra.mrb[0].mxu0 %v482
  %v1308 = vpop.f32.mrb[0].mxu0
  %v1309 = vadd.f32 %v1196, %v1308
  %v1310 = vpop.f32.mrb[0].mxu0
  %v1311 = vadd.f32 %v1198, %v1310
  %v1312 = vpop.f32.mrb[0].mxu0
  %v1313 = vadd.f32 %v1200, %v1312
  %v1314 = vpop.f32.mrb[0].mxu0
  %v1315 = vadd.f32 %v1202, %v1314
  %1316 = vmatprep.mubr.bf16.mxu0 %v490
  %1317 = vmatmul.mubr.bf16.gmra.mrb[0].mxu0 %v489
  %v1318 = vpop.f32.mrb[0].mxu0
  %v1319 = vadd.f32 %v1206, %v1318
  %v1320 = vpop.f32.mrb[0].mxu0
  %v1321 = vadd.f32 %v1208, %v1320
  %v1322 = vpop.f32.mrb[0].mxu0
  %v1323 = vadd.f32 %v1210, %v1322
  %v1324 = vpop.f32.mrb[0].mxu0
  %v1325 = vadd.f32 %v1212, %v1324
  %1326 = vmatprep.mubr.bf16.mxu0 %v497
  %1327 = vmatmul.mubr.bf16.gmra.mrb[0].mxu0 %v496
  %v1328 = vpop.f32.mrb[0].mxu0
  %v1329 = vadd.f32 %v1216, %v1328
  %v1330 = vpop.f32.mrb[0].mxu0
  %v1331 = vadd.f32 %v1218, %v1330
  %v1332 = vpop.f32.mrb[0].mxu0
  %v1333 = vadd.f32 %v1220, %v1332
  %v1334 = vpop.f32.mrb[0].mxu0
  %v1335 = vadd.f32 %v1222, %v1334
  %1336 = vmatprep.mubr.bf16.mxu0 %v504
  %1337 = vmatmul.mubr.bf16.gmra.mrb[0].mxu0 %v503
  %v1338 = vpop.f32.mrb[0].mxu0
  %v1339 = vadd.f32 %v1226, %v1338
  %v1340 = vpop.f32.mrb[0].mxu0
  %v1341 = vadd.f32 %v1228, %v1340
  %v1342 = vpop.f32.mrb[0].mxu0
  %v1343 = vadd.f32 %v1230, %v1342
  %v1344 = vpop.f32.mrb[0].mxu0
  %v1345 = vadd.f32 %v1232, %v1344
  %1346 = vmatprep.mubr.bf16.mxu0 %v511
  %1347 = vmatmul.mubr.bf16.gmra.mrb[0].mxu0 %v510
  %v1348 = vpop.f32.mrb[0].mxu0
  %v1349 = vadd.f32 %v1236, %v1348
  %v1350 = vpop.f32.mrb[0].mxu0
  %v1351 = vadd.f32 %v1238, %v1350
  %v1352 = vpop.f32.mrb[0].mxu0
  %v1353 = vadd.f32 %v1240, %v1352
  %v1354 = vpop.f32.mrb[0].mxu0
  %v1355 = vadd.f32 %v1242, %v1354
  %1356 = vdwg.mxu0
  %1357 = vmatprep.subr.bf16.mxu0 %v972
  %1358 = vmatpush1.bf16.msra.mxu0 %v971
  %1359 = vmatprep.subr.bf16.mxu0 %v974
  %1360 = vmatpush1.bf16.msra.mxu0 %v973
  %1361 = vmatprep.subr.bf16.mxu0 %v976
  %1362 = vmatpush1.bf16.msra.mxu0 %v975
  %1363 = vmatprep.subr.bf16.mxu0 %v978
  %1364 = vmatpush1.bf16.msra.mxu0 %v977
  %1365 = vmatprep.subr.bf16.mxu0 %v980
  %1366 = vmatpush1.bf16.msra.mxu0 %v979
  %1367 = vmatprep.subr.bf16.mxu0 %v982
  %1368 = vmatpush1.bf16.msra.mxu0 %v981
  %1369 = vmatprep.subr.bf16.mxu0 %v984
  %1370 = vmatpush1.bf16.msra.mxu0 %v983
  %1371 = vmatprep.subr.bf16.mxu0 %v986
  %1372 = vmatpush1.bf16.msra.mxu0 %v985
  %1373 = vmatprep.subr.bf16.mxu0 %v988
  %1374 = vmatpush1.bf16.msra.mxu0 %v987
  %1375 = vmatprep.subr.bf16.mxu0 %v990
  %1376 = vmatpush1.bf16.msra.mxu0 %v989
  %1377 = vmatprep.subr.bf16.mxu0 %v992
  %1378 = vmatpush1.bf16.msra.mxu0 %v991
  %1379 = vmatprep.subr.bf16.mxu0 %v994
  %1380 = vmatpush1.bf16.msra.mxu0 %v993
  %1381 = vmatprep.subr.bf16.mxu0 %v996
  %1382 = vmatpush1.bf16.msra.mxu0 %v995
  %1383 = vmatprep.subr.bf16.mxu0 %v998
  %1384 = vmatpush1.bf16.msra.mxu0 %v997
  %1385 = vmatprep.subr.bf16.mxu0 %v1000
  %1386 = vmatpush1.bf16.msra.mxu0 %v999
  %1387 = vmatprep.subr.bf16.mxu0 %v1002
  %1388 = vmatpush1.bf16.msra.mxu0 %v1001
  %1389 = vmatprep.mubr.bf16.mxu0 %v464
  %1390 = vmatmul.mubr.bf16.gmra.mrb[0].mxu0 %v463
  %v1391 = vpop.f32.mrb[0].mxu0
  %v1392 = vadd.f32 %v1279, %v1391
  %v1393 = vpop.f32.mrb[0].mxu0
  %v1394 = vadd.f32 %v1281, %v1393
  %v1395 = vpop.f32.mrb[0].mxu0
  %v1396 = vadd.f32 %v1283, %v1395
  %v1397 = vpop.f32.mrb[0].mxu0
  %v1398 = vadd.f32 %v1285, %v1397
  %1399 = vmatprep.mubr.bf16.mxu0 %v471
  %1400 = vmatmul.mubr.bf16.gmra.mrb[0].mxu0 %v470
  %v1401 = vpop.f32.mrb[0].mxu0
  %v1402 = vadd.f32 %v1289, %v1401
  %v1403 = vpop.f32.mrb[0].mxu0
  %v1404 = vadd.f32 %v1291, %v1403
  %v1405 = vpop.f32.mrb[0].mxu0
  %v1406 = vadd.f32 %v1293, %v1405
  %v1407 = vpop.f32.mrb[0].mxu0
  %v1408 = vadd.f32 %v1295, %v1407
  %1409 = vmatprep.mubr.bf16.mxu0 %v478
  %1410 = vmatmul.mubr.bf16.gmra.mrb[0].mxu0 %v477
  %v1411 = vpop.f32.mrb[0].mxu0
  %v1412 = vadd.f32 %v1299, %v1411
  %v1413 = vpop.f32.mrb[0].mxu0
  %v1414 = vadd.f32 %v1301, %v1413
  %v1415 = vpop.f32.mrb[0].mxu0
  %v1416 = vadd.f32 %v1303, %v1415
  %v1417 = vpop.f32.mrb[0].mxu0
  %v1418 = vadd.f32 %v1305, %v1417
  %1419 = vmatprep.mubr.bf16.mxu0 %v485
  %1420 = vmatmul.mubr.bf16.gmra.mrb[0].mxu0 %v484
  %v1421 = vpop.f32.mrb[0].mxu0
  %v1422 = vadd.f32 %v1309, %v1421
  %v1423 = vpop.f32.mrb[0].mxu0
  %v1424 = vadd.f32 %v1311, %v1423
  %v1425 = vpop.f32.mrb[0].mxu0
  %v1426 = vadd.f32 %v1313, %v1425
  %v1427 = vpop.f32.mrb[0].mxu0
  %v1428 = vadd.f32 %v1315, %v1427
  %1429 = vmatprep.mubr.bf16.mxu0 %v492
  %1430 = vmatmul.mubr.bf16.gmra.mrb[0].mxu0 %v491
  %v1431 = vpop.f32.mrb[0].mxu0
  %v1432 = vadd.f32 %v1319, %v1431
  %v1433 = vpop.f32.mrb[0].mxu0
  %v1434 = vadd.f32 %v1321, %v1433
  %v1435 = vpop.f32.mrb[0].mxu0
  %v1436 = vadd.f32 %v1323, %v1435
  %v1437 = vpop.f32.mrb[0].mxu0
  %v1438 = vadd.f32 %v1325, %v1437
  %1439 = vmatprep.mubr.bf16.mxu0 %v499
  %1440 = vmatmul.mubr.bf16.gmra.mrb[0].mxu0 %v498
  %v1441 = vpop.f32.mrb[0].mxu0
  %v1442 = vadd.f32 %v1329, %v1441
  %v1443 = vpop.f32.mrb[0].mxu0
  %v1444 = vadd.f32 %v1331, %v1443
  %v1445 = vpop.f32.mrb[0].mxu0
  %v1446 = vadd.f32 %v1333, %v1445
  %v1447 = vpop.f32.mrb[0].mxu0
  %v1448 = vadd.f32 %v1335, %v1447
  %1449 = vmatprep.mubr.bf16.mxu0 %v506
  %1450 = vmatmul.mubr.bf16.gmra.mrb[0].mxu0 %v505
  %v1451 = vpop.f32.mrb[0].mxu0
  %v1452 = vadd.f32 %v1339, %v1451
  %v1453 = vpop.f32.mrb[0].mxu0
  %v1454 = vadd.f32 %v1341, %v1453
  %v1455 = vpop.f32.mrb[0].mxu0
  %v1456 = vadd.f32 %v1343, %v1455
  %v1457 = vpop.f32.mrb[0].mxu0
  %v1458 = vadd.f32 %v1345, %v1457
  %1459 = vmatprep.mubr.bf16.mxu0 %v513
  %1460 = vmatmul.mubr.bf16.gmra.mrb[0].mxu0 %v512
  %v1461 = vpop.f32.mrb[0].mxu0
  %v1462 = vadd.f32 %v1349, %v1461
  %v1463 = vpop.f32.mrb[0].mxu0
  %v1464 = vadd.f32 %v1351, %v1463
  %v1465 = vpop.f32.mrb[0].mxu0
  %v1466 = vadd.f32 %v1353, %v1465
  %v1467 = vpop.f32.mrb[0].mxu0
  %v1468 = vadd.f32 %v1355, %v1467
  %1469 = vdwg.mxu0
  %1470 = vmatprep.subr.bf16.mxu0 %v1004
  %1471 = vmatpush1.bf16.msra.mxu0 %v1003
  %1472 = vmatprep.subr.bf16.mxu0 %v1006
  %1473 = vmatpush1.bf16.msra.mxu0 %v1005
  %1474 = vmatprep.subr.bf16.mxu0 %v1008
  %1475 = vmatpush1.bf16.msra.mxu0 %v1007
  %1476 = vmatprep.subr.bf16.mxu0 %v1010
  %1477 = vmatpush1.bf16.msra.mxu0 %v1009
  %1478 = vmatprep.subr.bf16.mxu0 %v1012
  %1479 = vmatpush1.bf16.msra.mxu0 %v1011
  %1480 = vmatprep.subr.bf16.mxu0 %v1014
  %1481 = vmatpush1.bf16.msra.mxu0 %v1013
  %1482 = vmatprep.subr.bf16.mxu0 %v1016
  %1483 = vmatpush1.bf16.msra.mxu0 %v1015
  %1484 = vmatprep.subr.bf16.mxu0 %v1018
  %1485 = vmatpush1.bf16.msra.mxu0 %v1017
  %1486 = vmatprep.subr.bf16.mxu0 0
  %1487 = vmatpush1.bf16.msra.mxu0 0
  %1488 = vmatprep.subr.bf16.mxu0 0
  %1489 = vmatpush1.bf16.msra.mxu0 0
  %1490 = vmatprep.subr.bf16.mxu0 0
  %1491 = vmatpush1.bf16.msra.mxu0 0
  %1492 = vmatprep.subr.bf16.mxu0 0
  %1493 = vmatpush1.bf16.msra.mxu0 0
  %1494 = vmatprep.subr.bf16.mxu0 0
  %1495 = vmatpush1.bf16.msra.mxu0 0
  %1496 = vmatprep.subr.bf16.mxu0 0
  %1497 = vmatpush1.bf16.msra.mxu0 0
  %1498 = vmatprep.subr.bf16.mxu0 0
  %1499 = vmatpush1.bf16.msra.mxu0 0
  %1500 = vmatprep.subr.bf16.mxu0 0
  %1501 = vmatpush1.bf16.msra.mxu0 0
  %1502 = vmatprep.mubr.bf16.mxu0 0
  %1503 = vmatmul.mubr.bf16.gmra.mrb[0].mxu0 %v465
  %v1504 = vpop.f32.mrb[0].mxu0
  %v1505 = vadd.f32 %v1392, %v1504
  %v1506 = vpop.f32.mrb[0].mxu0
  %v1507 = vadd.f32 %v1394, %v1506
  %v1508 = vpop.f32.mrb[0].mxu0
  %v1509 = vadd.f32 %v1396, %v1508
  %v1510 = vpop.f32.mrb[0].mxu0
  %v1511 = vadd.f32 %v1398, %v1510
  %1512 = vmatprep.mubr.bf16.mxu0 0
  %1513 = vmatmul.mubr.bf16.gmra.mrb[0].mxu0 %v472
  %v1514 = vpop.f32.mrb[0].mxu0
  %v1515 = vadd.f32 %v1402, %v1514
  %v1516 = vpop.f32.mrb[0].mxu0
  %v1517 = vadd.f32 %v1404, %v1516
  %v1518 = vpop.f32.mrb[0].mxu0
  %v1519 = vadd.f32 %v1406, %v1518
  %v1520 = vpop.f32.mrb[0].mxu0
  %v1521 = vadd.f32 %v1408, %v1520
  %1522 = vmatprep.mubr.bf16.mxu0 0
  %1523 = vmatmul.mubr.bf16.gmra.mrb[0].mxu0 %v479
  %v1524 = vpop.f32.mrb[0].mxu0
  %v1525 = vadd.f32 %v1412, %v1524
  %v1526 = vpop.f32.mrb[0].mxu0
  %v1527 = vadd.f32 %v1414, %v1526
  %v1528 = vpop.f32.mrb[0].mxu0
  %v1529 = vadd.f32 %v1416, %v1528
  %v1530 = vpop.f32.mrb[0].mxu0
  %v1531 = vadd.f32 %v1418, %v1530
  %1532 = vmatprep.mubr.bf16.mxu0 0
  %1533 = vmatmul.mubr.bf16.gmra.mrb[0].mxu0 %v486
  %v1534 = vpop.f32.mrb[0].mxu0
  %v1535 = vadd.f32 %v1422, %v1534
  %v1536 = vpop.f32.mrb[0].mxu0
  %v1537 = vadd.f32 %v1424, %v1536
  %v1538 = vpop.f32.mrb[0].mxu0
  %v1539 = vadd.f32 %v1426, %v1538
  %v1540 = vpop.f32.mrb[0].mxu0
  %v1541 = vadd.f32 %v1428, %v1540
  %1542 = vmatprep.mubr.bf16.mxu0 0
  %1543 = vmatmul.mubr.bf16.gmra.mrb[0].mxu0 %v493
  %v1544 = vpop.f32.mrb[0].mxu0
  %v1545 = vadd.f32 %v1432, %v1544
  %v1546 = vpop.f32.mrb[0].mxu0
  %v1547 = vadd.f32 %v1434, %v1546
  %v1548 = vpop.f32.mrb[0].mxu0
  %v1549 = vadd.f32 %v1436, %v1548
  %v1550 = vpop.f32.mrb[0].mxu0
  %v1551 = vadd.f32 %v1438, %v1550
  %1552 = vmatprep.mubr.bf16.mxu0 0
  %1553 = vmatmul.mubr.bf16.gmra.mrb[0].mxu0 %v500
  %v1554 = vpop.f32.mrb[0].mxu0
  %v1555 = vadd.f32 %v1442, %v1554
  %v1556 = vpop.f32.mrb[0].mxu0
  %v1557 = vadd.f32 %v1444, %v1556
  %v1558 = vpop.f32.mrb[0].mxu0
  %v1559 = vadd.f32 %v1446, %v1558
  %v1560 = vpop.f32.mrb[0].mxu0
  %v1561 = vadd.f32 %v1448, %v1560
  %1562 = vmatprep.mubr.bf16.mxu0 0
  %1563 = vmatmul.mubr.bf16.gmra.mrb[0].mxu0 %v507
  %v1564 = vpop.f32.mrb[0].mxu0
  %v1565 = vadd.f32 %v1452, %v1564
  %v1566 = vpop.f32.mrb[0].mxu0
  %v1567 = vadd.f32 %v1454, %v1566
  %v1568 = vpop.f32.mrb[0].mxu0
  %v1569 = vadd.f32 %v1456, %v1568
  %v1570 = vpop.f32.mrb[0].mxu0
  %v1571 = vadd.f32 %v1458, %v1570
  %1572 = vmatprep.mubr.bf16.mxu0 0
  %1573 = vmatmul.mubr.bf16.gmra.mrb[0].mxu0 %v514
  %v1574 = vpop.f32.mrb[0].mxu0
  %v1575 = vadd.f32 %v1462, %v1574
  %v1576 = vpop.f32.mrb[0].mxu0
  %v1577 = vadd.f32 %v1464, %v1576
  %v1578 = vpop.f32.mrb[0].mxu0
  %v1579 = vadd.f32 %v1466, %v1578
  %v1580 = vpop.f32.mrb[0].mxu0
  %v1581 = vadd.f32 %v1468, %v1580
  %1582 = vdwg.mxu0
  %v1583 = vmul.f32 %v1505, %v1505
  %v1584 = vmul.f32 %v1507, %v1507
  %v1585 = vmul.f32 %v1509, %v1509
  %v1586 = vmul.f32 %v1511, %v1511
  %v1587 = vmul.f32 %v1515, %v1515
  %v1588 = vmul.f32 %v1517, %v1517
  %v1589 = vmul.f32 %v1519, %v1519
  %v1590 = vmul.f32 %v1521, %v1521
  %v1591 = vmul.f32 %v1525, %v1525
  %v1592 = vmul.f32 %v1527, %v1527
  %v1593 = vmul.f32 %v1529, %v1529
  %v1594 = vmul.f32 %v1531, %v1531
  %v1595 = vmul.f32 %v1535, %v1535
  %v1596 = vmul.f32 %v1537, %v1537
  %v1597 = vmul.f32 %v1539, %v1539
  %v1598 = vmul.f32 %v1541, %v1541
  %v1599 = vmul.f32 %v1545, %v1545
  %v1600 = vmul.f32 %v1547, %v1547
  %v1601 = vmul.f32 %v1549, %v1549
  %v1602 = vmul.f32 %v1551, %v1551
  %v1603 = vmul.f32 %v1555, %v1555
  %v1604 = vmul.f32 %v1557, %v1557
  %v1605 = vmul.f32 %v1559, %v1559
  %v1606 = vmul.f32 %v1561, %v1561
  %v1607 = vmul.f32 %v1565, %v1565
  %v1608 = vmul.f32 %v1567, %v1567
  %v1609 = vmul.f32 %v1569, %v1569
  %v1610 = vmul.f32 %v1571, %v1571
  %v1611 = vmul.f32 %v1575, %v1575
  %v1612 = vmul.f32 %v1577, %v1577
  %v1613 = vmul.f32 %v1579, %v1579
  %v1614 = vmul.f32 %v1581, %v1581
  %v1615 = vsel %vm77, 1, 0
  %v1616 = vsel %vm78, 1, 0
  %v1617 = vsel %vm79, 1, 0
  %v1618 = vsel %vm80, 1, 0
  %v1619 = vsel %vm81, 1, 0
  %v1620 = vsel %vm82, 1, 0
  %v1621 = vsel %vm83, 1, 0
  %v1622 = vsel %vm84, 1, 0
  %v1623 = vsel %vm85, 1, 0
  %v1624 = vsel %vm86, 1, 0
  %v1625 = vsel %vm87, 1, 0
  %v1626 = vsel %vm88, 1, 0
  %v1627 = vsel %vm89, 1, 0
  %v1628 = vsel %vm90, 1, 0
  %v1629 = vsel %vm91, 1, 0
  %v1630 = vsel %vm92, 1, 0
  %vm1631 = vcmp.eq.s32.totalorder %v1615, 1
  %vm1632 = vcmp.eq.s32.totalorder %v1616, 1
  %vm1633 = vcmp.eq.s32.totalorder %v1617, 1
  %vm1634 = vcmp.eq.s32.totalorder %v1618, 1
  %vm1635 = vcmp.eq.s32.totalorder %v1619, 1
  %vm1636 = vcmp.eq.s32.totalorder %v1620, 1
  %vm1637 = vcmp.eq.s32.totalorder %v1621, 1
  %vm1638 = vcmp.eq.s32.totalorder %v1622, 1
  %vm1639 = vcmp.eq.s32.totalorder %v1623, 1
  %vm1640 = vcmp.eq.s32.totalorder %v1624, 1
  %vm1641 = vcmp.eq.s32.totalorder %v1625, 1
  %vm1642 = vcmp.eq.s32.totalorder %v1626, 1
  %vm1643 = vcmp.eq.s32.totalorder %v1627, 1
  %vm1644 = vcmp.eq.s32.totalorder %v1628, 1
  %vm1645 = vcmp.eq.s32.totalorder %v1629, 1
  %vm1646 = vcmp.eq.s32.totalorder %v1630, 1
  %v1647 = vsel %vm1631, %v1583, 0.0
  %v1648 = vsel %vm1631, %v1584, 0.0
  %v1649 = vsel %vm1632, %v1585, 0.0
  %v1650 = vsel %vm1632, %v1586, 0.0
  %v1651 = vsel %vm1633, %v1587, 0.0
  %v1652 = vsel %vm1633, %v1588, 0.0
  %v1653 = vsel %vm1634, %v1589, 0.0
  %v1654 = vsel %vm1634, %v1590, 0.0
  %v1655 = vsel %vm1635, %v1591, 0.0
  %v1656 = vsel %vm1635, %v1592, 0.0
  %v1657 = vsel %vm1636, %v1593, 0.0
  %v1658 = vsel %vm1636, %v1594, 0.0
  %v1659 = vsel %vm1637, %v1595, 0.0
  %v1660 = vsel %vm1637, %v1596, 0.0
  %v1661 = vsel %vm1638, %v1597, 0.0
  %v1662 = vsel %vm1638, %v1598, 0.0
  %v1663 = vsel %vm1639, %v1599, 0.0
  %v1664 = vsel %vm1639, %v1600, 0.0
  %v1665 = vsel %vm1640, %v1601, 0.0
  %v1666 = vsel %vm1640, %v1602, 0.0
  %v1667 = vsel %vm1641, %v1603, 0.0
  %v1668 = vsel %vm1641, %v1604, 0.0
  %v1669 = vsel %vm1642, %v1605, 0.0
  %v1670 = vsel %vm1642, %v1606, 0.0
  %v1671 = vsel %vm1643, %v1607, 0.0
  %v1672 = vsel %vm1643, %v1608, 0.0
  %v1673 = vsel %vm1644, %v1609, 0.0
  %v1674 = vsel %vm1644, %v1610, 0.0
  %v1675 = vsel %vm1645, %v1611, 0.0
  %v1676 = vsel %vm1645, %v1612, 0.0
  %v1677 = vsel %vm1646, %v1613, 0.0
  %v1678 = vsel %vm1646, %v1614, 0.0
  %vm1679 = vcmp.eq.s32.totalorder %v94, 0
  %v1680 = vadd.f32 %v1647, %v1648
  %v1681 = vadd.f32 %v1680, %v1649
  %v1682 = vadd.f32 %v1681, %v1650
  %v1683 = vadd.f32 %v1682, %v1651
  %v1684 = vadd.f32 %v1683, %v1652
  %v1685 = vadd.f32 %v1684, %v1653
  %v1686 = vadd.f32 %v1685, %v1654
  %v1687 = vadd.f32 %v1686, %v1655
  %v1688 = vadd.f32 %v1687, %v1656
  %v1689 = vadd.f32 %v1688, %v1657
  %v1690 = vadd.f32 %v1689, %v1658
  %v1691 = vadd.f32 %v1690, %v1659
  %v1692 = vadd.f32 %v1691, %v1660
  %v1693 = vadd.f32 %v1692, %v1661
  %v1694 = vadd.f32 %v1693, %v1662
  %v1695 = vadd.f32 %v1694, %v1663
  %v1696 = vadd.f32 %v1695, %v1664
  %v1697 = vadd.f32 %v1696, %v1665
  %v1698 = vadd.f32 %v1697, %v1666
  %v1699 = vadd.f32 %v1698, %v1667
  %v1700 = vadd.f32 %v1699, %v1668
  %v1701 = vadd.f32 %v1700, %v1669
  %v1702 = vadd.f32 %v1701, %v1670
  %v1703 = vadd.f32 %v1702, %v1671
  %v1704 = vadd.f32 %v1703, %v1672
  %v1705 = vadd.f32 %v1704, %v1673
  %v1706 = vadd.f32 %v1705, %v1674
  %v1707 = vadd.f32 %v1706, %v1675
  %v1708 = vadd.f32 %v1707, %v1676
  %v1709 = vadd.f32 %v1708, %v1677
  %v1710 = vadd.f32 %v1709, %v1678
  %1711 = vadd.xlane.f32.xlu0 %v1710
  %v1712 = vpop.xlane.xlu0 %1711
  %v1713 = vrot.slane %v1712, 4
  %v1714 = vadd.f32 %v1712, %v1713
  %v1715 = vrot.slane %v1714, 2
  %v1716 = vadd.f32 %v1714, %v1715
  %v1717 = vrot.slane %v1716, 1
  %v1718 = vadd.f32 %v1716, %v1717
  %s1719 = vtos %v1718
  %v1720 = vstv %s1719
  %v1721 = vsel %vm1679, %v1720, 0.0
  %v1722 = vxor.u32 %v1505, 2147483648
  %v1723 = vxor.u32 %v1507, 2147483648
  %v1724 = vxor.u32 %v1509, 2147483648
  %v1725 = vxor.u32 %v1511, 2147483648
  %v1726 = vxor.u32 %v1515, 2147483648
  %v1727 = vxor.u32 %v1517, 2147483648
  %v1728 = vxor.u32 %v1519, 2147483648
  %v1729 = vxor.u32 %v1521, 2147483648
  %v1730 = vxor.u32 %v1525, 2147483648
  %v1731 = vxor.u32 %v1527, 2147483648
  %v1732 = vxor.u32 %v1529, 2147483648
  %v1733 = vxor.u32 %v1531, 2147483648
  %v1734 = vxor.u32 %v1535, 2147483648
  %v1735 = vxor.u32 %v1537, 2147483648
  %v1736 = vxor.u32 %v1539, 2147483648
  %v1737 = vxor.u32 %v1541, 2147483648
  %v1738 = vxor.u32 %v1545, 2147483648
  %v1739 = vxor.u32 %v1547, 2147483648
  %v1740 = vxor.u32 %v1549, 2147483648
  %v1741 = vxor.u32 %v1551, 2147483648
  %v1742 = vxor.u32 %v1555, 2147483648
  %v1743 = vxor.u32 %v1557, 2147483648
  %v1744 = vxor.u32 %v1559, 2147483648
  %v1745 = vxor.u32 %v1561, 2147483648
  %v1746 = vxor.u32 %v1565, 2147483648
  %v1747 = vxor.u32 %v1567, 2147483648
  %v1748 = vxor.u32 %v1569, 2147483648
  %v1749 = vxor.u32 %v1571, 2147483648
  %v1750 = vxor.u32 %v1575, 2147483648
  %v1751 = vxor.u32 %v1577, 2147483648
  %v1752 = vxor.u32 %v1579, 2147483648
  %v1753 = vxor.u32 %v1581, 2147483648
  %v1754 = vmul.f32 %v1722, 1.442695
  %v1755 = vpow.pop %v1754
  %v1756 = vmul.f32 %v1723, 1.442695
  %v1757 = vpow.pop %v1756
  %v1758 = vmul.f32 %v1724, 1.442695
  %v1759 = vpow.pop %v1758
  %v1760 = vmul.f32 %v1725, 1.442695
  %v1761 = vpow.pop %v1760
  %v1762 = vmul.f32 %v1726, 1.442695
  %v1763 = vpow.pop %v1762
  %v1764 = vmul.f32 %v1727, 1.442695
  %v1765 = vpow.pop %v1764
  %v1766 = vmul.f32 %v1728, 1.442695
  %v1767 = vpow.pop %v1766
  %v1768 = vmul.f32 %v1729, 1.442695
  %v1769 = vpow.pop %v1768
  %v1770 = vmul.f32 %v1730, 1.442695
  %v1771 = vpow.pop %v1770
  %v1772 = vmul.f32 %v1731, 1.442695
  %v1773 = vpow.pop %v1772
  %v1774 = vmul.f32 %v1732, 1.442695
  %v1775 = vpow.pop %v1774
  %v1776 = vmul.f32 %v1733, 1.442695
  %v1777 = vpow.pop %v1776
  %v1778 = vmul.f32 %v1734, 1.442695
  %v1779 = vpow.pop %v1778
  %v1780 = vmul.f32 %v1735, 1.442695
  %v1781 = vpow.pop %v1780
  %v1782 = vmul.f32 %v1736, 1.442695
  %v1783 = vpow.pop %v1782
  %v1784 = vmul.f32 %v1737, 1.442695
  %v1785 = vpow.pop %v1784
  %v1786 = vmul.f32 %v1738, 1.442695
  %v1787 = vpow.pop %v1786
  %v1788 = vmul.f32 %v1739, 1.442695
  %v1789 = vpow.pop %v1788
  %v1790 = vmul.f32 %v1740, 1.442695
  %v1791 = vpow.pop %v1790
  %v1792 = vmul.f32 %v1741, 1.442695
  %v1793 = vpow.pop %v1792
  %v1794 = vmul.f32 %v1742, 1.442695
  %v1795 = vpow.pop %v1794
  %v1796 = vmul.f32 %v1743, 1.442695
  %v1797 = vpow.pop %v1796
  %v1798 = vmul.f32 %v1744, 1.442695
  %v1799 = vpow.pop %v1798
  %v1800 = vmul.f32 %v1745, 1.442695
  %v1801 = vpow.pop %v1800
  %v1802 = vmul.f32 %v1746, 1.442695
  %v1803 = vpow.pop %v1802
  %v1804 = vmul.f32 %v1747, 1.442695
  %v1805 = vpow.pop %v1804
  %v1806 = vmul.f32 %v1748, 1.442695
  %v1807 = vpow.pop %v1806
  %v1808 = vmul.f32 %v1749, 1.442695
  %v1809 = vpow.pop %v1808
  %v1810 = vmul.f32 %v1750, 1.442695
  %v1811 = vpow.pop %v1810
  %v1812 = vmul.f32 %v1751, 1.442695
  %v1813 = vpow.pop %v1812
  %v1814 = vmul.f32 %v1752, 1.442695
  %v1815 = vpow.pop %v1814
  %v1816 = vmul.f32 %v1753, 1.442695
  %v1817 = vpow.pop %v1816
  %v1818 = vadd.f32 %v1755, 1.0
  %v1819 = vadd.f32 %v1757, 1.0
  %v1820 = vadd.f32 %v1759, 1.0
  %v1821 = vadd.f32 %v1761, 1.0
  %v1822 = vadd.f32 %v1763, 1.0
  %v1823 = vadd.f32 %v1765, 1.0
  %v1824 = vadd.f32 %v1767, 1.0
  %v1825 = vadd.f32 %v1769, 1.0
  %v1826 = vadd.f32 %v1771, 1.0
  %v1827 = vadd.f32 %v1773, 1.0
  %v1828 = vadd.f32 %v1775, 1.0
  %v1829 = vadd.f32 %v1777, 1.0
  %v1830 = vadd.f32 %v1779, 1.0
  %v1831 = vadd.f32 %v1781, 1.0
  %v1832 = vadd.f32 %v1783, 1.0
  %v1833 = vadd.f32 %v1785, 1.0
  %v1834 = vadd.f32 %v1787, 1.0
  %v1835 = vadd.f32 %v1789, 1.0
  %v1836 = vadd.f32 %v1791, 1.0
  %v1837 = vadd.f32 %v1793, 1.0
  %v1838 = vadd.f32 %v1795, 1.0
  %v1839 = vadd.f32 %v1797, 1.0
  %v1840 = vadd.f32 %v1799, 1.0
  %v1841 = vadd.f32 %v1801, 1.0
  %v1842 = vadd.f32 %v1803, 1.0
  %v1843 = vadd.f32 %v1805, 1.0
  %v1844 = vadd.f32 %v1807, 1.0
  %v1845 = vadd.f32 %v1809, 1.0
  %v1846 = vadd.f32 %v1811, 1.0
  %v1847 = vadd.f32 %v1813, 1.0
  %v1848 = vadd.f32 %v1815, 1.0
  %v1849 = vadd.f32 %v1817, 1.0
  %v1850 = vrcp.pop %v1818
  %v1851 = vmul.f32 1.0, %v1850
  %v1852 = vrcp.pop %v1819
  %v1853 = vmul.f32 1.0, %v1852
  %v1854 = vrcp.pop %v1820
  %v1855 = vmul.f32 1.0, %v1854
  %v1856 = vrcp.pop %v1821
  %v1857 = vmul.f32 1.0, %v1856
  %v1858 = vrcp.pop %v1822
  %v1859 = vmul.f32 1.0, %v1858
  %v1860 = vrcp.pop %v1823
  %v1861 = vmul.f32 1.0, %v1860
  %v1862 = vrcp.pop %v1824
  %v1863 = vmul.f32 1.0, %v1862
  %v1864 = vrcp.pop %v1825
  %v1865 = vmul.f32 1.0, %v1864
  %v1866 = vrcp.pop %v1826
  %v1867 = vmul.f32 1.0, %v1866
  %v1868 = vrcp.pop %v1827
  %v1869 = vmul.f32 1.0, %v1868
  %v1870 = vrcp.pop %v1828
  %v1871 = vmul.f32 1.0, %v1870
  %v1872 = vrcp.pop %v1829
  %v1873 = vmul.f32 1.0, %v1872
  %v1874 = vrcp.pop %v1830
  %v1875 = vmul.f32 1.0, %v1874
  %v1876 = vrcp.pop %v1831
  %v1877 = vmul.f32 1.0, %v1876
  %v1878 = vrcp.pop %v1832
  %v1879 = vmul.f32 1.0, %v1878
  %v1880 = vrcp.pop %v1833
  %v1881 = vmul.f32 1.0, %v1880
  %v1882 = vrcp.pop %v1834
  %v1883 = vmul.f32 1.0, %v1882
  %v1884 = vrcp.pop %v1835
  %v1885 = vmul.f32 1.0, %v1884
  %v1886 = vrcp.pop %v1836
  %v1887 = vmul.f32 1.0, %v1886
  %v1888 = vrcp.pop %v1837
  %v1889 = vmul.f32 1.0, %v1888
  %v1890 = vrcp.pop %v1838
  %v1891 = vmul.f32 1.0, %v1890
  %v1892 = vrcp.pop %v1839
  %v1893 = vmul.f32 1.0, %v1892
  %v1894 = vrcp.pop %v1840
  %v1895 = vmul.f32 1.0, %v1894
  %v1896 = vrcp.pop %v1841
  %v1897 = vmul.f32 1.0, %v1896
  %v1898 = vrcp.pop %v1842
  %v1899 = vmul.f32 1.0, %v1898
  %v1900 = vrcp.pop %v1843
  %v1901 = vmul.f32 1.0, %v1900
  %v1902 = vrcp.pop %v1844
  %v1903 = vmul.f32 1.0, %v1902
  %v1904 = vrcp.pop %v1845
  %v1905 = vmul.f32 1.0, %v1904
  %v1906 = vrcp.pop %v1846
  %v1907 = vmul.f32 1.0, %v1906
  %v1908 = vrcp.pop %v1847
  %v1909 = vmul.f32 1.0, %v1908
  %v1910 = vrcp.pop %v1848
  %v1911 = vmul.f32 1.0, %v1910
  %v1912 = vrcp.pop %v1849
  %v1913 = vmul.f32 1.0, %v1912
  %1914 = vst [vmem:[%s10] sm:$0xff] %v1851
  %1915 = vst [vmem:[%s10 + $0x8] sm:$0xff] %v1853
  %1916 = vst [vmem:[%s10 + $0x10] sm:$0xff] %v1855
  %1917 = vst [vmem:[%s10 + $0x18] sm:$0xff] %v1857
  %1918 = vst [vmem:[%s10 + $0x20] sm:$0xff] %v1859
  %1919 = vst [vmem:[%s10 + $0x28] sm:$0xff] %v1861
  %1920 = vst [vmem:[%s10 + $0x30] sm:$0xff] %v1863
  %1921 = vst [vmem:[%s10 + $0x38] sm:$0xff] %v1865
  %1922 = vst [vmem:[%s10 + $0x40] sm:$0xff] %v1867
  %1923 = vst [vmem:[%s10 + $0x48] sm:$0xff] %v1869
  %1924 = vst [vmem:[%s10 + $0x50] sm:$0xff] %v1871
  %1925 = vst [vmem:[%s10 + $0x58] sm:$0xff] %v1873
  %1926 = vst [vmem:[%s10 + $0x60] sm:$0xff] %v1875
  %1927 = vst [vmem:[%s10 + $0x68] sm:$0xff] %v1877
  %1928 = vst [vmem:[%s10 + $0x70] sm:$0xff] %v1879
  %1929 = vst [vmem:[%s10 + $0x78] sm:$0xff] %v1881
  %1930 = vst [vmem:[%s10 + $0x80] sm:$0xff] %v1883
  %1931 = vst [vmem:[%s10 + $0x88] sm:$0xff] %v1885
  %1932 = vst [vmem:[%s10 + $0x90] sm:$0xff] %v1887
  %1933 = vst [vmem:[%s10 + $0x98] sm:$0xff] %v1889
  %1934 = vst [vmem:[%s10 + $0xa0] sm:$0xff] %v1891
  %1935 = vst [vmem:[%s10 + $0xa8] sm:$0xff] %v1893
  %1936 = vst [vmem:[%s10 + $0xb0] sm:$0xff] %v1895
  %1937 = vst [vmem:[%s10 + $0xb8] sm:$0xff] %v1897
  %1938 = vst [vmem:[%s10 + $0xc0] sm:$0xff] %v1899
  %1939 = vst [vmem:[%s10 + $0xc8] sm:$0xff] %v1901
  %1940 = vst [vmem:[%s10 + $0xd0] sm:$0xff] %v1903
  %1941 = vst [vmem:[%s10 + $0xd8] sm:$0xff] %v1905
  %1942 = vst [vmem:[%s10 + $0xe0] sm:$0xff] %v1907
  %1943 = vst [vmem:[%s10 + $0xe8] sm:$0xff] %v1909
  %1944 = vst [vmem:[%s10 + $0xf0] sm:$0xff] %v1911
  %1945 = vst [vmem:[%s10 + $0xf8] sm:$0xff] %v1913
  %v1946 = vpack.c.bf16 %v1855, %v1851
  %v1947 = vpack.c.bf16 %v1857, %v1853
  %v1948 = vpack.c.bf16 %v1863, %v1859
  %v1949 = vpack.c.bf16 %v1865, %v1861
  %v1950 = vpack.c.bf16 %v1871, %v1867
  %v1951 = vpack.c.bf16 %v1873, %v1869
  %v1952 = vpack.c.bf16 %v1879, %v1875
  %v1953 = vpack.c.bf16 %v1881, %v1877
  %v1954 = vpack.c.bf16 %v1887, %v1883
  %v1955 = vpack.c.bf16 %v1889, %v1885
  %v1956 = vpack.c.bf16 %v1895, %v1891
  %v1957 = vpack.c.bf16 %v1897, %v1893
  %v1958 = vpack.c.bf16 %v1903, %v1899
  %v1959 = vpack.c.bf16 %v1905, %v1901
  %v1960 = vpack.c.bf16 %v1911, %v1907
  %v1961 = vpack.c.bf16 %v1913, %v1909
  %v1962 = vld [vmem:[%s3] sm:$0xf]
  %v1963 = vld [vmem:[%s3 + $0x4] sm:$0xf]
  %v1964 = vld [vmem:[%s3 + $0x8] sm:$0xf]
  %v1965 = vld [vmem:[%s3 + $0xc] sm:$0xf]
  %v1966 = vld [vmem:[%s3 + $0x10] sm:$0xf]
  %v1967 = vld [vmem:[%s3 + $0x14] sm:$0xf]
  %v1968 = vld [vmem:[%s3 + $0x18] sm:$0xf]
  %v1969 = vld [vmem:[%s3 + $0x1c] sm:$0xf]
  %v1970 = vld [vmem:[%s3 + $0x20] sm:$0xf]
  %v1971 = vld [vmem:[%s3 + $0x24] sm:$0xf]
  %v1972 = vld [vmem:[%s3 + $0x28] sm:$0xf]
  %v1973 = vld [vmem:[%s3 + $0x2c] sm:$0xf]
  %v1974 = vld [vmem:[%s3 + $0x30] sm:$0xf]
  %v1975 = vld [vmem:[%s3 + $0x34] sm:$0xf]
  %v1976 = vld [vmem:[%s3 + $0x38] sm:$0xf]
  %v1977 = vld [vmem:[%s3 + $0x3c] sm:$0xf]
  %v1978 = vld [vmem:[%s3 + $0x40] sm:$0xf]
  %v1979 = vld [vmem:[%s3 + $0x44] sm:$0xf]
  %v1980 = vld [vmem:[%s3 + $0x48] sm:$0xf]
  %v1981 = vld [vmem:[%s3 + $0x4c] sm:$0xf]
  %v1982 = vld [vmem:[%s3 + $0x50] sm:$0xf]
  %v1983 = vld [vmem:[%s3 + $0x54] sm:$0xf]
  %v1984 = vld [vmem:[%s3 + $0x58] sm:$0xf]
  %v1985 = vld [vmem:[%s3 + $0x5c] sm:$0xf]
  %v1986 = vld [vmem:[%s3 + $0x60] sm:$0xf]
  %v1987 = vld [vmem:[%s3 + $0x64] sm:$0xf]
  %v1988 = vld [vmem:[%s3 + $0x68] sm:$0xf]
  %v1989 = vld [vmem:[%s3 + $0x6c] sm:$0xf]
  %v1990 = vld [vmem:[%s3 + $0x70] sm:$0xf]
  %v1991 = vld [vmem:[%s3 + $0x74] sm:$0xf]
  %v1992 = vld [vmem:[%s3 + $0x78] sm:$0xf]
  %v1993 = vld [vmem:[%s3 + $0x7c] sm:$0xf]
  %v1994 = vld [vmem:[%s7] sm:$0x1]
  %v1996 = vlaneseq
  %v1997 = vshrl.u32 %v1996, 7
  %v1998 = vsub.s32 0, %v1997
  %v1999 = vrot.slane %v1994, %v1998
  %v2033 = vunpack.c.l.b16 %v1962
  %v2034 = vunpack.c.l.b16 %v1963
  %v2035 = vunpack.c.l.b16 %v1964
  %v2036 = vunpack.c.l.b16 %v1965
  %v2037 = vunpack.c.l.b16 %v1966
  %v2038 = vunpack.c.l.b16 %v1967
  %v2039 = vunpack.c.l.b16 %v1968
  %v2040 = vunpack.c.l.b16 %v1969
  %v2041 = vunpack.c.l.b16 %v1970
  %v2042 = vunpack.c.l.b16 %v1971
  %v2043 = vunpack.c.l.b16 %v1972
  %v2044 = vunpack.c.l.b16 %v1973
  %v2045 = vunpack.c.l.b16 %v1974
  %v2046 = vunpack.c.l.b16 %v1975
  %v2047 = vunpack.c.l.b16 %v1976
  %v2048 = vunpack.c.l.b16 %v1977
  %v2049 = vunpack.c.l.b16 %v1978
  %v2050 = vunpack.c.l.b16 %v1979
  %v2051 = vunpack.c.l.b16 %v1980
  %v2052 = vunpack.c.l.b16 %v1981
  %v2053 = vunpack.c.l.b16 %v1982
  %v2054 = vunpack.c.l.b16 %v1983
  %v2055 = vunpack.c.l.b16 %v1984
  %v2056 = vunpack.c.l.b16 %v1985
  %v2057 = vunpack.c.l.b16 %v1986
  %v2058 = vunpack.c.l.b16 %v1987
  %v2059 = vunpack.c.l.b16 %v1988
  %v2060 = vunpack.c.l.b16 %v1989
  %v2061 = vunpack.c.l.b16 %v1990
  %v2062 = vunpack.c.l.b16 %v1991
  %v2063 = vunpack.c.l.b16 %v1992
  %v2064 = vunpack.c.l.b16 %v1993
  %v2065 = vpack.c.b16 %v2034, %v2033
  %v2066 = vpack.c.b16 %v2036, %v2035
  %v2067 = vpack.c.b16 %v2038, %v2037
  %v2068 = vpack.c.b16 %v2040, %v2039
  %v2069 = vpack.c.b16 %v2042, %v2041
  %v2070 = vpack.c.b16 %v2044, %v2043
  %v2071 = vpack.c.b16 %v2046, %v2045
  %v2072 = vpack.c.b16 %v2048, %v2047
  %v2073 = vpack.c.b16 %v2050, %v2049
  %v2074 = vpack.c.b16 %v2052, %v2051
  %v2075 = vpack.c.b16 %v2054, %v2053
  %v2076 = vpack.c.b16 %v2056, %v2055
  %v2077 = vpack.c.b16 %v2058, %v2057
  %v2078 = vpack.c.b16 %v2060, %v2059
  %v2079 = vpack.c.b16 %v2062, %v2061
  %v2080 = vpack.c.b16 %v2064, %v2063
  %2097 = vmatprep.subr.bf16.mxu0 0
  %2098 = vmatpush1.bf16.msra.mxu0 %v2065
  %2099 = vmatprep.subr.bf16.mxu0 0
  %2100 = vmatpush1.bf16.msra.mxu0 %v2066
  %2101 = vmatprep.subr.bf16.mxu0 0
  %2102 = vmatpush1.bf16.msra.mxu0 %v2067
  %2103 = vmatprep.subr.bf16.mxu0 0
  %2104 = vmatpush1.bf16.msra.mxu0 %v2068
  %2105 = vmatprep.subr.bf16.mxu0 0
  %2106 = vmatpush1.bf16.msra.mxu0 %v2069
  %2107 = vmatprep.subr.bf16.mxu0 0
  %2108 = vmatpush1.bf16.msra.mxu0 %v2070
  %2109 = vmatprep.subr.bf16.mxu0 0
  %2110 = vmatpush1.bf16.msra.mxu0 %v2071
  %2111 = vmatprep.subr.bf16.mxu0 0
  %2112 = vmatpush1.bf16.msra.mxu0 %v2072
  %2113 = vmatprep.subr.bf16.mxu0 0
  %2114 = vmatpush1.bf16.msra.mxu0 %v2073
  %2115 = vmatprep.subr.bf16.mxu0 0
  %2116 = vmatpush1.bf16.msra.mxu0 %v2074
  %2117 = vmatprep.subr.bf16.mxu0 0
  %2118 = vmatpush1.bf16.msra.mxu0 %v2075
  %2119 = vmatprep.subr.bf16.mxu0 0
  %2120 = vmatpush1.bf16.msra.mxu0 %v2076
  %2121 = vmatprep.subr.bf16.mxu0 0
  %2122 = vmatpush1.bf16.msra.mxu0 %v2077
  %2123 = vmatprep.subr.bf16.mxu0 0
  %2124 = vmatpush1.bf16.msra.mxu0 %v2078
  %2125 = vmatprep.subr.bf16.mxu0 0
  %2126 = vmatpush1.bf16.msra.mxu0 %v2079
  %2127 = vmatprep.subr.bf16.mxu0 0
  %2128 = vmatpush1.bf16.msra.mxu0 %v2080
  %2129 = vmatprep.mubr.bf16.mxu0 %v1947
  %2130 = vmatmul.mubr.bf16.gmra.mrb[0].mxu0 %v1946
  %v2131 = vpop.f32.mrb[0].mxu0
  %v2132 = vadd.f32 %v1999, %v2131
  %v2133 = vpop.f32.mrb[0].mxu0
  %v2134 = vpop.f32.mrb[0].mxu0
  %v2135 = vadd.f32 %v1999, %v2134
  %v2136 = vpop.f32.mrb[0].mxu0
  %2137 = vmatprep.mubr.bf16.mxu0 %v1949
  %2138 = vmatmul.mubr.bf16.gmra.mrb[0].mxu0 %v1948
  %v2139 = vpop.f32.mrb[0].mxu0
  %v2140 = vadd.f32 %v1999, %v2139
  %v2141 = vpop.f32.mrb[0].mxu0
  %v2142 = vpop.f32.mrb[0].mxu0
  %v2143 = vadd.f32 %v1999, %v2142
  %v2144 = vpop.f32.mrb[0].mxu0
  %2145 = vmatprep.mubr.bf16.mxu0 %v1951
  %2146 = vmatmul.mubr.bf16.gmra.mrb[0].mxu0 %v1950
  %v2147 = vpop.f32.mrb[0].mxu0
  %v2148 = vadd.f32 %v1999, %v2147
  %v2149 = vpop.f32.mrb[0].mxu0
  %v2150 = vpop.f32.mrb[0].mxu0
  %v2151 = vadd.f32 %v1999, %v2150
  %v2152 = vpop.f32.mrb[0].mxu0
  %2153 = vmatprep.mubr.bf16.mxu0 %v1953
  %2154 = vmatmul.mubr.bf16.gmra.mrb[0].mxu0 %v1952
  %v2155 = vpop.f32.mrb[0].mxu0
  %v2156 = vadd.f32 %v1999, %v2155
  %v2157 = vpop.f32.mrb[0].mxu0
  %v2158 = vpop.f32.mrb[0].mxu0
  %v2159 = vadd.f32 %v1999, %v2158
  %v2160 = vpop.f32.mrb[0].mxu0
  %2161 = vmatprep.mubr.bf16.mxu0 %v1955
  %2162 = vmatmul.mubr.bf16.gmra.mrb[0].mxu0 %v1954
  %v2163 = vpop.f32.mrb[0].mxu0
  %v2164 = vadd.f32 %v1999, %v2163
  %v2165 = vpop.f32.mrb[0].mxu0
  %v2166 = vpop.f32.mrb[0].mxu0
  %v2167 = vadd.f32 %v1999, %v2166
  %v2168 = vpop.f32.mrb[0].mxu0
  %2169 = vmatprep.mubr.bf16.mxu0 %v1957
  %2170 = vmatmul.mubr.bf16.gmra.mrb[0].mxu0 %v1956
  %v2171 = vpop.f32.mrb[0].mxu0
  %v2172 = vadd.f32 %v1999, %v2171
  %v2173 = vpop.f32.mrb[0].mxu0
  %v2174 = vpop.f32.mrb[0].mxu0
  %v2175 = vadd.f32 %v1999, %v2174
  %v2176 = vpop.f32.mrb[0].mxu0
  %2177 = vmatprep.mubr.bf16.mxu0 %v1959
  %2178 = vmatmul.mubr.bf16.gmra.mrb[0].mxu0 %v1958
  %v2179 = vpop.f32.mrb[0].mxu0
  %v2180 = vadd.f32 %v1999, %v2179
  %v2181 = vpop.f32.mrb[0].mxu0
  %v2182 = vpop.f32.mrb[0].mxu0
  %v2183 = vadd.f32 %v1999, %v2182
  %v2184 = vpop.f32.mrb[0].mxu0
  %2185 = vmatprep.mubr.bf16.mxu0 %v1961
  %2186 = vmatmul.mubr.bf16.gmra.mrb[0].mxu0 %v1960
  %v2187 = vpop.f32.mrb[0].mxu0
  %v2188 = vadd.f32 %v1999, %v2187
  %v2189 = vpop.f32.mrb[0].mxu0
  %v2190 = vpop.f32.mrb[0].mxu0
  %v2191 = vadd.f32 %v1999, %v2190
  %v2192 = vpop.f32.mrb[0].mxu0
  %2193 = vdwg.mxu0
  %v2194 = vmul.f32 %v2132, %v2132
  %v2195 = vmul.f32 %v2135, %v2135
  %v2196 = vmul.f32 %v2140, %v2140
  %v2197 = vmul.f32 %v2143, %v2143
  %v2198 = vmul.f32 %v2148, %v2148
  %v2199 = vmul.f32 %v2151, %v2151
  %v2200 = vmul.f32 %v2156, %v2156
  %v2201 = vmul.f32 %v2159, %v2159
  %v2202 = vmul.f32 %v2164, %v2164
  %v2203 = vmul.f32 %v2167, %v2167
  %v2204 = vmul.f32 %v2172, %v2172
  %v2205 = vmul.f32 %v2175, %v2175
  %v2206 = vmul.f32 %v2180, %v2180
  %v2207 = vmul.f32 %v2183, %v2183
  %v2208 = vmul.f32 %v2188, %v2188
  %v2209 = vmul.f32 %v2191, %v2191
  %v2210 = vsel %vm1631, %v2194, 0.0
  %v2211 = vsel %vm1632, %v2195, 0.0
  %v2212 = vsel %vm1633, %v2196, 0.0
  %v2213 = vsel %vm1634, %v2197, 0.0
  %v2214 = vsel %vm1635, %v2198, 0.0
  %v2215 = vsel %vm1636, %v2199, 0.0
  %v2216 = vsel %vm1637, %v2200, 0.0
  %v2217 = vsel %vm1638, %v2201, 0.0
  %v2218 = vsel %vm1639, %v2202, 0.0
  %v2219 = vsel %vm1640, %v2203, 0.0
  %v2220 = vsel %vm1641, %v2204, 0.0
  %v2221 = vsel %vm1642, %v2205, 0.0
  %v2222 = vsel %vm1643, %v2206, 0.0
  %v2223 = vsel %vm1644, %v2207, 0.0
  %v2224 = vsel %vm1645, %v2208, 0.0
  %v2225 = vsel %vm1646, %v2209, 0.0
  %vm2226 = vcmp.eq.s32.totalorder %v94, 1
  %v2227 = vadd.f32 %v2210, %v2211
  %v2228 = vadd.f32 %v2227, %v2212
  %v2229 = vadd.f32 %v2228, %v2213
  %v2230 = vadd.f32 %v2229, %v2214
  %v2231 = vadd.f32 %v2230, %v2215
  %v2232 = vadd.f32 %v2231, %v2216
  %v2233 = vadd.f32 %v2232, %v2217
  %v2234 = vadd.f32 %v2233, %v2218
  %v2235 = vadd.f32 %v2234, %v2219
  %v2236 = vadd.f32 %v2235, %v2220
  %v2237 = vadd.f32 %v2236, %v2221
  %v2238 = vadd.f32 %v2237, %v2222
  %v2239 = vadd.f32 %v2238, %v2223
  %v2240 = vadd.f32 %v2239, %v2224
  %v2241 = vadd.f32 %v2240, %v2225
  %2242 = vadd.xlane.f32.xlu0 %v2241
  %v2243 = vpop.xlane.xlu0 %2242
  %v2244 = vrot.slane %v2243, 4
  %v2245 = vadd.f32 %v2243, %v2244
  %v2246 = vrot.slane %v2245, 2
  %v2247 = vadd.f32 %v2245, %v2246
  %v2248 = vrot.slane %v2247, 1
  %v2249 = vadd.f32 %v2247, %v2248
  %s2250 = vtos %v2249
  %v2251 = vstv %s2250
  %v2252 = vsel %vm2226, %v2251, %v1721
  %v2253 = vxor.u32 %v2132, 2147483648
  %v2254 = vxor.u32 %v2135, 2147483648
  %v2255 = vxor.u32 %v2140, 2147483648
  %v2256 = vxor.u32 %v2143, 2147483648
  %v2257 = vxor.u32 %v2148, 2147483648
  %v2258 = vxor.u32 %v2151, 2147483648
  %v2259 = vxor.u32 %v2156, 2147483648
  %v2260 = vxor.u32 %v2159, 2147483648
  %v2261 = vxor.u32 %v2164, 2147483648
  %v2262 = vxor.u32 %v2167, 2147483648
  %v2263 = vxor.u32 %v2172, 2147483648
  %v2264 = vxor.u32 %v2175, 2147483648
  %v2265 = vxor.u32 %v2180, 2147483648
  %v2266 = vxor.u32 %v2183, 2147483648
  %v2267 = vxor.u32 %v2188, 2147483648
  %v2268 = vxor.u32 %v2191, 2147483648
  %v2269 = vmul.f32 %v2253, 1.442695
  %v2270 = vpow.pop %v2269
  %v2271 = vmul.f32 %v2254, 1.442695
  %v2272 = vpow.pop %v2271
  %v2273 = vmul.f32 %v2255, 1.442695
  %v2274 = vpow.pop %v2273
  %v2275 = vmul.f32 %v2256, 1.442695
  %v2276 = vpow.pop %v2275
  %v2277 = vmul.f32 %v2257, 1.442695
  %v2278 = vpow.pop %v2277
  %v2279 = vmul.f32 %v2258, 1.442695
  %v2280 = vpow.pop %v2279
  %v2281 = vmul.f32 %v2259, 1.442695
  %v2282 = vpow.pop %v2281
  %v2283 = vmul.f32 %v2260, 1.442695
  %v2284 = vpow.pop %v2283
  %v2285 = vmul.f32 %v2261, 1.442695
  %v2286 = vpow.pop %v2285
  %v2287 = vmul.f32 %v2262, 1.442695
  %v2288 = vpow.pop %v2287
  %v2289 = vmul.f32 %v2263, 1.442695
  %v2290 = vpow.pop %v2289
  %v2291 = vmul.f32 %v2264, 1.442695
  %v2292 = vpow.pop %v2291
  %v2293 = vmul.f32 %v2265, 1.442695
  %v2294 = vpow.pop %v2293
  %v2295 = vmul.f32 %v2266, 1.442695
  %v2296 = vpow.pop %v2295
  %v2297 = vmul.f32 %v2267, 1.442695
  %v2298 = vpow.pop %v2297
  %v2299 = vmul.f32 %v2268, 1.442695
  %v2300 = vpow.pop %v2299
  %v2301 = vadd.f32 %v2270, 1.0
  %v2302 = vadd.f32 %v2272, 1.0
  %v2303 = vadd.f32 %v2274, 1.0
  %v2304 = vadd.f32 %v2276, 1.0
  %v2305 = vadd.f32 %v2278, 1.0
  %v2306 = vadd.f32 %v2280, 1.0
  %v2307 = vadd.f32 %v2282, 1.0
  %v2308 = vadd.f32 %v2284, 1.0
  %v2309 = vadd.f32 %v2286, 1.0
  %v2310 = vadd.f32 %v2288, 1.0
  %v2311 = vadd.f32 %v2290, 1.0
  %v2312 = vadd.f32 %v2292, 1.0
  %v2313 = vadd.f32 %v2294, 1.0
  %v2314 = vadd.f32 %v2296, 1.0
  %v2315 = vadd.f32 %v2298, 1.0
  %v2316 = vadd.f32 %v2300, 1.0
  %v2317 = vrcp.pop %v2301
  %v2318 = vmul.f32 1.0, %v2317
  %v2319 = vrcp.pop %v2302
  %v2320 = vmul.f32 1.0, %v2319
  %v2321 = vrcp.pop %v2303
  %v2322 = vmul.f32 1.0, %v2321
  %v2323 = vrcp.pop %v2304
  %v2324 = vmul.f32 1.0, %v2323
  %v2325 = vrcp.pop %v2305
  %v2326 = vmul.f32 1.0, %v2325
  %v2327 = vrcp.pop %v2306
  %v2328 = vmul.f32 1.0, %v2327
  %v2329 = vrcp.pop %v2307
  %v2330 = vmul.f32 1.0, %v2329
  %v2331 = vrcp.pop %v2308
  %v2332 = vmul.f32 1.0, %v2331
  %v2333 = vrcp.pop %v2309
  %v2334 = vmul.f32 1.0, %v2333
  %v2335 = vrcp.pop %v2310
  %v2336 = vmul.f32 1.0, %v2335
  %v2337 = vrcp.pop %v2311
  %v2338 = vmul.f32 1.0, %v2337
  %v2339 = vrcp.pop %v2312
  %v2340 = vmul.f32 1.0, %v2339
  %v2341 = vrcp.pop %v2313
  %v2342 = vmul.f32 1.0, %v2341
  %v2343 = vrcp.pop %v2314
  %v2344 = vmul.f32 1.0, %v2343
  %v2345 = vrcp.pop %v2315
  %v2346 = vmul.f32 1.0, %v2345
  %v2347 = vrcp.pop %v2316
  %v2348 = vmul.f32 1.0, %v2347
  %2349 = vst [vmem:[%s11] sm:$0xff] %v2318
  %2350 = vst [vmem:[%s11 + $0x8] sm:$0xff] %v2320
  %2351 = vst [vmem:[%s11 + $0x10] sm:$0xff] %v2322
  %2352 = vst [vmem:[%s11 + $0x18] sm:$0xff] %v2324
  %2353 = vst [vmem:[%s11 + $0x20] sm:$0xff] %v2326
  %2354 = vst [vmem:[%s11 + $0x28] sm:$0xff] %v2328
  %2355 = vst [vmem:[%s11 + $0x30] sm:$0xff] %v2330
  %2356 = vst [vmem:[%s11 + $0x38] sm:$0xff] %v2332
  %2357 = vst [vmem:[%s11 + $0x40] sm:$0xff] %v2334
  %2358 = vst [vmem:[%s11 + $0x48] sm:$0xff] %v2336
  %2359 = vst [vmem:[%s11 + $0x50] sm:$0xff] %v2338
  %2360 = vst [vmem:[%s11 + $0x58] sm:$0xff] %v2340
  %2361 = vst [vmem:[%s11 + $0x60] sm:$0xff] %v2342
  %2362 = vst [vmem:[%s11 + $0x68] sm:$0xff] %v2344
  %2363 = vst [vmem:[%s11 + $0x70] sm:$0xff] %v2346
  %2364 = vst [vmem:[%s11 + $0x78] sm:$0xff] %v2348
  %v2365 = vpack.c.bf16 %v2320, %v2318
  %v2366 = vpack.c.bf16 %v2324, %v2322
  %v2367 = vpack.c.bf16 %v2328, %v2326
  %v2368 = vpack.c.bf16 %v2332, %v2330
  %v2369 = vpack.c.bf16 %v2336, %v2334
  %v2370 = vpack.c.bf16 %v2340, %v2338
  %v2371 = vpack.c.bf16 %v2344, %v2342
  %v2372 = vpack.c.bf16 %v2348, %v2346
  %v2373 = vld [vmem:[%s4] sm:$0xf]
  %v2374 = vld [vmem:[%s4 + $0x4] sm:$0xf]
  %v2375 = vld [vmem:[%s4 + $0x8] sm:$0xf]
  %v2376 = vld [vmem:[%s4 + $0xc] sm:$0xf]
  %v2377 = vld [vmem:[%s4 + $0x10] sm:$0xf]
  %v2378 = vld [vmem:[%s4 + $0x14] sm:$0xf]
  %v2379 = vld [vmem:[%s4 + $0x18] sm:$0xf]
  %v2380 = vld [vmem:[%s4 + $0x1c] sm:$0xf]
  %v2381 = vld [vmem:[%s4 + $0x20] sm:$0xf]
  %v2382 = vld [vmem:[%s4 + $0x24] sm:$0xf]
  %v2383 = vld [vmem:[%s4 + $0x28] sm:$0xf]
  %v2384 = vld [vmem:[%s4 + $0x2c] sm:$0xf]
  %v2385 = vld [vmem:[%s4 + $0x30] sm:$0xf]
  %v2386 = vld [vmem:[%s4 + $0x34] sm:$0xf]
  %v2387 = vld [vmem:[%s4 + $0x38] sm:$0xf]
  %v2388 = vld [vmem:[%s4 + $0x3c] sm:$0xf]
  %v2389 = vld [vmem:[%s8] sm:$0x1]
  %v2391 = vlaneseq
  %v2392 = vshrl.u32 %v2391, 7
  %v2393 = vsub.s32 0, %v2392
  %v2394 = vrot.slane %v2389, %v2393
  %v2412 = vunpack.c.l.b16 %v2373
  %v2413 = vunpack.c.l.b16 %v2374
  %v2414 = vunpack.c.l.b16 %v2375
  %v2415 = vunpack.c.l.b16 %v2376
  %v2416 = vunpack.c.l.b16 %v2377
  %v2417 = vunpack.c.l.b16 %v2378
  %v2418 = vunpack.c.l.b16 %v2379
  %v2419 = vunpack.c.l.b16 %v2380
  %v2420 = vunpack.c.l.b16 %v2381
  %v2421 = vunpack.c.l.b16 %v2382
  %v2422 = vunpack.c.l.b16 %v2383
  %v2423 = vunpack.c.l.b16 %v2384
  %v2424 = vunpack.c.l.b16 %v2385
  %v2425 = vunpack.c.l.b16 %v2386
  %v2426 = vunpack.c.l.b16 %v2387
  %v2427 = vunpack.c.l.b16 %v2388
  %v2428 = vpack.c.b16 %v2413, %v2412
  %v2429 = vpack.c.b16 %v2415, %v2414
  %v2430 = vpack.c.b16 %v2417, %v2416
  %v2431 = vpack.c.b16 %v2419, %v2418
  %v2432 = vpack.c.b16 %v2421, %v2420
  %v2433 = vpack.c.b16 %v2423, %v2422
  %v2434 = vpack.c.b16 %v2425, %v2424
  %v2435 = vpack.c.b16 %v2427, %v2426
  %2444 = vmatprep.subr.bf16.mxu0 0
  %2445 = vmatpush1.bf16.msra.mxu0 %v2428
  %2446 = vmatprep.subr.bf16.mxu0 0
  %2447 = vmatpush1.bf16.msra.mxu0 %v2429
  %2448 = vmatprep.subr.bf16.mxu0 0
  %2449 = vmatpush1.bf16.msra.mxu0 %v2430
  %2450 = vmatprep.subr.bf16.mxu0 0
  %2451 = vmatpush1.bf16.msra.mxu0 %v2431
  %2452 = vmatprep.subr.bf16.mxu0 0
  %2453 = vmatpush1.bf16.msra.mxu0 %v2432
  %2454 = vmatprep.subr.bf16.mxu0 0
  %2455 = vmatpush1.bf16.msra.mxu0 %v2433
  %2456 = vmatprep.subr.bf16.mxu0 0
  %2457 = vmatpush1.bf16.msra.mxu0 %v2434
  %2458 = vmatprep.subr.bf16.mxu0 0
  %2459 = vmatpush1.bf16.msra.mxu0 %v2435
  %2460 = vmatprep.subr.bf16.mxu0 0
  %2461 = vmatpush1.bf16.msra.mxu0 0
  %2462 = vmatprep.subr.bf16.mxu0 0
  %2463 = vmatpush1.bf16.msra.mxu0 0
  %2464 = vmatprep.subr.bf16.mxu0 0
  %2465 = vmatpush1.bf16.msra.mxu0 0
  %2466 = vmatprep.subr.bf16.mxu0 0
  %2467 = vmatpush1.bf16.msra.mxu0 0
  %2468 = vmatprep.subr.bf16.mxu0 0
  %2469 = vmatpush1.bf16.msra.mxu0 0
  %2470 = vmatprep.subr.bf16.mxu0 0
  %2471 = vmatpush1.bf16.msra.mxu0 0
  %2472 = vmatprep.subr.bf16.mxu0 0
  %2473 = vmatpush1.bf16.msra.mxu0 0
  %2474 = vmatprep.subr.bf16.mxu0 0
  %2475 = vmatpush1.bf16.msra.mxu0 0
  %2476 = vmatprep.mubr.bf16.mxu0 0
  %2477 = vmatmul.mubr.bf16.gmra.mrb[0].mxu0 %v2365
  %v2478 = vpop.f32.mrb[0].mxu0
  %v2479 = vadd.f32 %v2394, %v2478
  %v2480 = vpop.f32.mrb[0].mxu0
  %v2481 = vpop.f32.mrb[0].mxu0
  %v2482 = vadd.f32 %v2394, %v2481
  %v2483 = vpop.f32.mrb[0].mxu0
  %2484 = vmatprep.mubr.bf16.mxu0 0
  %2485 = vmatmul.mubr.bf16.gmra.mrb[0].mxu0 %v2366
  %v2486 = vpop.f32.mrb[0].mxu0
  %v2487 = vadd.f32 %v2394, %v2486
  %v2488 = vpop.f32.mrb[0].mxu0
  %v2489 = vpop.f32.mrb[0].mxu0
  %v2490 = vadd.f32 %v2394, %v2489
  %v2491 = vpop.f32.mrb[0].mxu0
  %2492 = vmatprep.mubr.bf16.mxu0 0
  %2493 = vmatmul.mubr.bf16.gmra.mrb[0].mxu0 %v2367
  %v2494 = vpop.f32.mrb[0].mxu0
  %v2495 = vadd.f32 %v2394, %v2494
  %v2496 = vpop.f32.mrb[0].mxu0
  %v2497 = vpop.f32.mrb[0].mxu0
  %v2498 = vadd.f32 %v2394, %v2497
  %v2499 = vpop.f32.mrb[0].mxu0
  %2500 = vmatprep.mubr.bf16.mxu0 0
  %2501 = vmatmul.mubr.bf16.gmra.mrb[0].mxu0 %v2368
  %v2502 = vpop.f32.mrb[0].mxu0
  %v2503 = vadd.f32 %v2394, %v2502
  %v2504 = vpop.f32.mrb[0].mxu0
  %v2505 = vpop.f32.mrb[0].mxu0
  %v2506 = vadd.f32 %v2394, %v2505
  %v2507 = vpop.f32.mrb[0].mxu0
  %2508 = vmatprep.mubr.bf16.mxu0 0
  %2509 = vmatmul.mubr.bf16.gmra.mrb[0].mxu0 %v2369
  %v2510 = vpop.f32.mrb[0].mxu0
  %v2511 = vadd.f32 %v2394, %v2510
  %v2512 = vpop.f32.mrb[0].mxu0
  %v2513 = vpop.f32.mrb[0].mxu0
  %v2514 = vadd.f32 %v2394, %v2513
  %v2515 = vpop.f32.mrb[0].mxu0
  %2516 = vmatprep.mubr.bf16.mxu0 0
  %2517 = vmatmul.mubr.bf16.gmra.mrb[0].mxu0 %v2370
  %v2518 = vpop.f32.mrb[0].mxu0
  %v2519 = vadd.f32 %v2394, %v2518
  %v2520 = vpop.f32.mrb[0].mxu0
  %v2521 = vpop.f32.mrb[0].mxu0
  %v2522 = vadd.f32 %v2394, %v2521
  %v2523 = vpop.f32.mrb[0].mxu0
  %2524 = vmatprep.mubr.bf16.mxu0 0
  %2525 = vmatmul.mubr.bf16.gmra.mrb[0].mxu0 %v2371
  %v2526 = vpop.f32.mrb[0].mxu0
  %v2527 = vadd.f32 %v2394, %v2526
  %v2528 = vpop.f32.mrb[0].mxu0
  %v2529 = vpop.f32.mrb[0].mxu0
  %v2530 = vadd.f32 %v2394, %v2529
  %v2531 = vpop.f32.mrb[0].mxu0
  %2532 = vmatprep.mubr.bf16.mxu0 0
  %2533 = vmatmul.mubr.bf16.gmra.mrb[0].mxu0 %v2372
  %v2534 = vpop.f32.mrb[0].mxu0
  %v2535 = vadd.f32 %v2394, %v2534
  %v2536 = vpop.f32.mrb[0].mxu0
  %v2537 = vpop.f32.mrb[0].mxu0
  %v2538 = vadd.f32 %v2394, %v2537
  %v2539 = vpop.f32.mrb[0].mxu0
  %2540 = vdwg.mxu0
  %v2541 = vmul.f32 %v2479, %v2479
  %v2542 = vmul.f32 %v2482, %v2482
  %v2543 = vmul.f32 %v2487, %v2487
  %v2544 = vmul.f32 %v2490, %v2490
  %v2545 = vmul.f32 %v2495, %v2495
  %v2546 = vmul.f32 %v2498, %v2498
  %v2547 = vmul.f32 %v2503, %v2503
  %v2548 = vmul.f32 %v2506, %v2506
  %v2549 = vmul.f32 %v2511, %v2511
  %v2550 = vmul.f32 %v2514, %v2514
  %v2551 = vmul.f32 %v2519, %v2519
  %v2552 = vmul.f32 %v2522, %v2522
  %v2553 = vmul.f32 %v2527, %v2527
  %v2554 = vmul.f32 %v2530, %v2530
  %v2555 = vmul.f32 %v2535, %v2535
  %v2556 = vmul.f32 %v2538, %v2538
  %v2557 = vsel %vm1631, %v2541, 0.0
  %v2558 = vsel %vm1632, %v2542, 0.0
  %v2559 = vsel %vm1633, %v2543, 0.0
  %v2560 = vsel %vm1634, %v2544, 0.0
  %v2561 = vsel %vm1635, %v2545, 0.0
  %v2562 = vsel %vm1636, %v2546, 0.0
  %v2563 = vsel %vm1637, %v2547, 0.0
  %v2564 = vsel %vm1638, %v2548, 0.0
  %v2565 = vsel %vm1639, %v2549, 0.0
  %v2566 = vsel %vm1640, %v2550, 0.0
  %v2567 = vsel %vm1641, %v2551, 0.0
  %v2568 = vsel %vm1642, %v2552, 0.0
  %v2569 = vsel %vm1643, %v2553, 0.0
  %v2570 = vsel %vm1644, %v2554, 0.0
  %v2571 = vsel %vm1645, %v2555, 0.0
  %v2572 = vsel %vm1646, %v2556, 0.0
  %vm2573 = vcmp.eq.s32.totalorder %v94, 2
  %v2574 = vadd.f32 %v2557, %v2558
  %v2575 = vadd.f32 %v2574, %v2559
  %v2576 = vadd.f32 %v2575, %v2560
  %v2577 = vadd.f32 %v2576, %v2561
  %v2578 = vadd.f32 %v2577, %v2562
  %v2579 = vadd.f32 %v2578, %v2563
  %v2580 = vadd.f32 %v2579, %v2564
  %v2581 = vadd.f32 %v2580, %v2565
  %v2582 = vadd.f32 %v2581, %v2566
  %v2583 = vadd.f32 %v2582, %v2567
  %v2584 = vadd.f32 %v2583, %v2568
  %v2585 = vadd.f32 %v2584, %v2569
  %v2586 = vadd.f32 %v2585, %v2570
  %v2587 = vadd.f32 %v2586, %v2571
  %v2588 = vadd.f32 %v2587, %v2572
  %2589 = vadd.xlane.f32.xlu0 %v2588
  %v2590 = vpop.xlane.xlu0 %2589
  %v2591 = vrot.slane %v2590, 4
  %v2592 = vadd.f32 %v2590, %v2591
  %v2593 = vrot.slane %v2592, 2
  %v2594 = vadd.f32 %v2592, %v2593
  %v2595 = vrot.slane %v2594, 1
  %v2596 = vadd.f32 %v2594, %v2595
  %s2597 = vtos %v2596
  %v2598 = vstv %s2597
  %v2599 = vsel %vm2573, %v2598, %v2252
  %v2600 = vxor.u32 %v2479, 2147483648
  %v2601 = vxor.u32 %v2482, 2147483648
  %v2602 = vxor.u32 %v2487, 2147483648
  %v2603 = vxor.u32 %v2490, 2147483648
  %v2604 = vxor.u32 %v2495, 2147483648
  %v2605 = vxor.u32 %v2498, 2147483648
  %v2606 = vxor.u32 %v2503, 2147483648
  %v2607 = vxor.u32 %v2506, 2147483648
  %v2608 = vxor.u32 %v2511, 2147483648
  %v2609 = vxor.u32 %v2514, 2147483648
  %v2610 = vxor.u32 %v2519, 2147483648
  %v2611 = vxor.u32 %v2522, 2147483648
  %v2612 = vxor.u32 %v2527, 2147483648
  %v2613 = vxor.u32 %v2530, 2147483648
  %v2614 = vxor.u32 %v2535, 2147483648
  %v2615 = vxor.u32 %v2538, 2147483648
  %v2616 = vmul.f32 %v2600, 1.442695
  %v2617 = vpow.pop %v2616
  %v2618 = vmul.f32 %v2601, 1.442695
  %v2619 = vpow.pop %v2618
  %v2620 = vmul.f32 %v2602, 1.442695
  %v2621 = vpow.pop %v2620
  %v2622 = vmul.f32 %v2603, 1.442695
  %v2623 = vpow.pop %v2622
  %v2624 = vmul.f32 %v2604, 1.442695
  %v2625 = vpow.pop %v2624
  %v2626 = vmul.f32 %v2605, 1.442695
  %v2627 = vpow.pop %v2626
  %v2628 = vmul.f32 %v2606, 1.442695
  %v2629 = vpow.pop %v2628
  %v2630 = vmul.f32 %v2607, 1.442695
  %v2631 = vpow.pop %v2630
  %v2632 = vmul.f32 %v2608, 1.442695
  %v2633 = vpow.pop %v2632
  %v2634 = vmul.f32 %v2609, 1.442695
  %v2635 = vpow.pop %v2634
  %v2636 = vmul.f32 %v2610, 1.442695
  %v2637 = vpow.pop %v2636
  %v2638 = vmul.f32 %v2611, 1.442695
  %v2639 = vpow.pop %v2638
  %v2640 = vmul.f32 %v2612, 1.442695
  %v2641 = vpow.pop %v2640
  %v2642 = vmul.f32 %v2613, 1.442695
  %v2643 = vpow.pop %v2642
  %v2644 = vmul.f32 %v2614, 1.442695
  %v2645 = vpow.pop %v2644
  %v2646 = vmul.f32 %v2615, 1.442695
  %v2647 = vpow.pop %v2646
  %v2648 = vadd.f32 %v2617, 1.0
  %v2649 = vadd.f32 %v2619, 1.0
  %v2650 = vadd.f32 %v2621, 1.0
  %v2651 = vadd.f32 %v2623, 1.0
  %v2652 = vadd.f32 %v2625, 1.0
  %v2653 = vadd.f32 %v2627, 1.0
  %v2654 = vadd.f32 %v2629, 1.0
  %v2655 = vadd.f32 %v2631, 1.0
  %v2656 = vadd.f32 %v2633, 1.0
  %v2657 = vadd.f32 %v2635, 1.0
  %v2658 = vadd.f32 %v2637, 1.0
  %v2659 = vadd.f32 %v2639, 1.0
  %v2660 = vadd.f32 %v2641, 1.0
  %v2661 = vadd.f32 %v2643, 1.0
  %v2662 = vadd.f32 %v2645, 1.0
  %v2663 = vadd.f32 %v2647, 1.0
  %v2664 = vrcp.pop %v2648
  %v2665 = vmul.f32 1.0, %v2664
  %v2666 = vrcp.pop %v2649
  %v2667 = vmul.f32 1.0, %v2666
  %v2668 = vrcp.pop %v2650
  %v2669 = vmul.f32 1.0, %v2668
  %v2670 = vrcp.pop %v2651
  %v2671 = vmul.f32 1.0, %v2670
  %v2672 = vrcp.pop %v2652
  %v2673 = vmul.f32 1.0, %v2672
  %v2674 = vrcp.pop %v2653
  %v2675 = vmul.f32 1.0, %v2674
  %v2676 = vrcp.pop %v2654
  %v2677 = vmul.f32 1.0, %v2676
  %v2678 = vrcp.pop %v2655
  %v2679 = vmul.f32 1.0, %v2678
  %v2680 = vrcp.pop %v2656
  %v2681 = vmul.f32 1.0, %v2680
  %v2682 = vrcp.pop %v2657
  %v2683 = vmul.f32 1.0, %v2682
  %v2684 = vrcp.pop %v2658
  %v2685 = vmul.f32 1.0, %v2684
  %v2686 = vrcp.pop %v2659
  %v2687 = vmul.f32 1.0, %v2686
  %v2688 = vrcp.pop %v2660
  %v2689 = vmul.f32 1.0, %v2688
  %v2690 = vrcp.pop %v2661
  %v2691 = vmul.f32 1.0, %v2690
  %v2692 = vrcp.pop %v2662
  %v2693 = vmul.f32 1.0, %v2692
  %v2694 = vrcp.pop %v2663
  %v2695 = vmul.f32 1.0, %v2694
  %2696 = vst [vmem:[%s12] sm:$0xff] %v2665
  %2697 = vst [vmem:[%s12 + $0x8] sm:$0xff] %v2667
  %2698 = vst [vmem:[%s12 + $0x10] sm:$0xff] %v2669
  %2699 = vst [vmem:[%s12 + $0x18] sm:$0xff] %v2671
  %2700 = vst [vmem:[%s12 + $0x20] sm:$0xff] %v2673
  %2701 = vst [vmem:[%s12 + $0x28] sm:$0xff] %v2675
  %2702 = vst [vmem:[%s12 + $0x30] sm:$0xff] %v2677
  %2703 = vst [vmem:[%s12 + $0x38] sm:$0xff] %v2679
  %2704 = vst [vmem:[%s12 + $0x40] sm:$0xff] %v2681
  %2705 = vst [vmem:[%s12 + $0x48] sm:$0xff] %v2683
  %2706 = vst [vmem:[%s12 + $0x50] sm:$0xff] %v2685
  %2707 = vst [vmem:[%s12 + $0x58] sm:$0xff] %v2687
  %2708 = vst [vmem:[%s12 + $0x60] sm:$0xff] %v2689
  %2709 = vst [vmem:[%s12 + $0x68] sm:$0xff] %v2691
  %2710 = vst [vmem:[%s12 + $0x70] sm:$0xff] %v2693
  %2711 = vst [vmem:[%s12 + $0x78] sm:$0xff] %v2695
  %v2712 = vpack.c.bf16 %v2667, %v2665
  %v2713 = vpack.c.bf16 %v2671, %v2669
  %v2714 = vpack.c.bf16 %v2675, %v2673
  %v2715 = vpack.c.bf16 %v2679, %v2677
  %v2716 = vpack.c.bf16 %v2683, %v2681
  %v2717 = vpack.c.bf16 %v2687, %v2685
  %v2718 = vpack.c.bf16 %v2691, %v2689
  %v2719 = vpack.c.bf16 %v2695, %v2693
  %v2720 = vld [vmem:[%s5] sm:$0xf]
  %v2721 = vld [vmem:[%s5 + $0x4] sm:$0xf]
  %v2722 = vld [vmem:[%s5 + $0x8] sm:$0xf]
  %v2723 = vld [vmem:[%s5 + $0xc] sm:$0xf]
  %v2724 = vld [vmem:[%s5 + $0x10] sm:$0xf]
  %v2725 = vld [vmem:[%s5 + $0x14] sm:$0xf]
  %v2726 = vld [vmem:[%s5 + $0x18] sm:$0xf]
  %v2727 = vld [vmem:[%s5 + $0x1c] sm:$0xf]
  %v2728 = vld [vmem:[%s5 + $0x20] sm:$0xf]
  %v2729 = vld [vmem:[%s5 + $0x24] sm:$0xf]
  %v2730 = vld [vmem:[%s5 + $0x28] sm:$0xf]
  %v2731 = vld [vmem:[%s5 + $0x2c] sm:$0xf]
  %v2732 = vld [vmem:[%s5 + $0x30] sm:$0xf]
  %v2733 = vld [vmem:[%s5 + $0x34] sm:$0xf]
  %v2734 = vld [vmem:[%s5 + $0x38] sm:$0xf]
  %v2735 = vld [vmem:[%s5 + $0x3c] sm:$0xf]
  %v2736 = vld [vmem:[%s9] sm:$0x1]
  %v2738 = vlaneseq
  %v2739 = vshrl.u32 %v2738, 7
  %v2740 = vsub.s32 0, %v2739
  %v2741 = vrot.slane %v2736, %v2740
  %v2759 = vunpack.c.l.b16 %v2720
  %v2760 = vunpack.c.l.b16 %v2721
  %v2761 = vunpack.c.l.b16 %v2722
  %v2762 = vunpack.c.l.b16 %v2723
  %v2763 = vunpack.c.l.b16 %v2724
  %v2764 = vunpack.c.l.b16 %v2725
  %v2765 = vunpack.c.l.b16 %v2726
  %v2766 = vunpack.c.l.b16 %v2727
  %v2767 = vunpack.c.l.b16 %v2728
  %v2768 = vunpack.c.l.b16 %v2729
  %v2769 = vunpack.c.l.b16 %v2730
  %v2770 = vunpack.c.l.b16 %v2731
  %v2771 = vunpack.c.l.b16 %v2732
  %v2772 = vunpack.c.l.b16 %v2733
  %v2773 = vunpack.c.l.b16 %v2734
  %v2774 = vunpack.c.l.b16 %v2735
  %v2775 = vpack.c.b16 %v2760, %v2759
  %v2776 = vpack.c.b16 %v2762, %v2761
  %v2777 = vpack.c.b16 %v2764, %v2763
  %v2778 = vpack.c.b16 %v2766, %v2765
  %v2779 = vpack.c.b16 %v2768, %v2767
  %v2780 = vpack.c.b16 %v2770, %v2769
  %v2781 = vpack.c.b16 %v2772, %v2771
  %v2782 = vpack.c.b16 %v2774, %v2773
  %2791 = vmatprep.subr.bf16.mxu0 0
  %2792 = vmatpush1.bf16.msra.mxu0 %v2775
  %2793 = vmatprep.subr.bf16.mxu0 0
  %2794 = vmatpush1.bf16.msra.mxu0 %v2776
  %2795 = vmatprep.subr.bf16.mxu0 0
  %2796 = vmatpush1.bf16.msra.mxu0 %v2777
  %2797 = vmatprep.subr.bf16.mxu0 0
  %2798 = vmatpush1.bf16.msra.mxu0 %v2778
  %2799 = vmatprep.subr.bf16.mxu0 0
  %2800 = vmatpush1.bf16.msra.mxu0 %v2779
  %2801 = vmatprep.subr.bf16.mxu0 0
  %2802 = vmatpush1.bf16.msra.mxu0 %v2780
  %2803 = vmatprep.subr.bf16.mxu0 0
  %2804 = vmatpush1.bf16.msra.mxu0 %v2781
  %2805 = vmatprep.subr.bf16.mxu0 0
  %2806 = vmatpush1.bf16.msra.mxu0 %v2782
  %2807 = vmatprep.subr.bf16.mxu0 0
  %2808 = vmatpush1.bf16.msra.mxu0 0
  %2809 = vmatprep.subr.bf16.mxu0 0
  %2810 = vmatpush1.bf16.msra.mxu0 0
  %2811 = vmatprep.subr.bf16.mxu0 0
  %2812 = vmatpush1.bf16.msra.mxu0 0
  %2813 = vmatprep.subr.bf16.mxu0 0
  %2814 = vmatpush1.bf16.msra.mxu0 0
  %2815 = vmatprep.subr.bf16.mxu0 0
  %2816 = vmatpush1.bf16.msra.mxu0 0
  %2817 = vmatprep.subr.bf16.mxu0 0
  %2818 = vmatpush1.bf16.msra.mxu0 0
  %2819 = vmatprep.subr.bf16.mxu0 0
  %2820 = vmatpush1.bf16.msra.mxu0 0
  %2821 = vmatprep.subr.bf16.mxu0 0
  %2822 = vmatpush1.bf16.msra.mxu0 0
  %2823 = vmatprep.mubr.bf16.mxu0 0
  %2824 = vmatmul.mubr.bf16.gmra.mrb[0].mxu0 %v2712
  %v2825 = vpop.f32.mrb[0].mxu0
  %v2826 = vadd.f32 %v2741, %v2825
  %v2827 = vpop.f32.mrb[0].mxu0
  %v2828 = vpop.f32.mrb[0].mxu0
  %v2829 = vadd.f32 %v2741, %v2828
  %v2830 = vpop.f32.mrb[0].mxu0
  %2831 = vmatprep.mubr.bf16.mxu0 0
  %2832 = vmatmul.mubr.bf16.gmra.mrb[0].mxu0 %v2713
  %v2833 = vpop.f32.mrb[0].mxu0
  %v2834 = vadd.f32 %v2741, %v2833
  %v2835 = vpop.f32.mrb[0].mxu0
  %v2836 = vpop.f32.mrb[0].mxu0
  %v2837 = vadd.f32 %v2741, %v2836
  %v2838 = vpop.f32.mrb[0].mxu0
  %2839 = vmatprep.mubr.bf16.mxu0 0
  %2840 = vmatmul.mubr.bf16.gmra.mrb[0].mxu0 %v2714
  %v2841 = vpop.f32.mrb[0].mxu0
  %v2842 = vadd.f32 %v2741, %v2841
  %v2843 = vpop.f32.mrb[0].mxu0
  %v2844 = vpop.f32.mrb[0].mxu0
  %v2845 = vadd.f32 %v2741, %v2844
  %v2846 = vpop.f32.mrb[0].mxu0
  %2847 = vmatprep.mubr.bf16.mxu0 0
  %2848 = vmatmul.mubr.bf16.gmra.mrb[0].mxu0 %v2715
  %v2849 = vpop.f32.mrb[0].mxu0
  %v2850 = vadd.f32 %v2741, %v2849
  %v2851 = vpop.f32.mrb[0].mxu0
  %v2852 = vpop.f32.mrb[0].mxu0
  %v2853 = vadd.f32 %v2741, %v2852
  %v2854 = vpop.f32.mrb[0].mxu0
  %2855 = vmatprep.mubr.bf16.mxu0 0
  %2856 = vmatmul.mubr.bf16.gmra.mrb[0].mxu0 %v2716
  %v2857 = vpop.f32.mrb[0].mxu0
  %v2858 = vadd.f32 %v2741, %v2857
  %v2859 = vpop.f32.mrb[0].mxu0
  %v2860 = vpop.f32.mrb[0].mxu0
  %v2861 = vadd.f32 %v2741, %v2860
  %v2862 = vpop.f32.mrb[0].mxu0
  %2863 = vmatprep.mubr.bf16.mxu0 0
  %2864 = vmatmul.mubr.bf16.gmra.mrb[0].mxu0 %v2717
  %v2865 = vpop.f32.mrb[0].mxu0
  %v2866 = vadd.f32 %v2741, %v2865
  %v2867 = vpop.f32.mrb[0].mxu0
  %v2868 = vpop.f32.mrb[0].mxu0
  %v2869 = vadd.f32 %v2741, %v2868
  %v2870 = vpop.f32.mrb[0].mxu0
  %2871 = vmatprep.mubr.bf16.mxu0 0
  %2872 = vmatmul.mubr.bf16.gmra.mrb[0].mxu0 %v2718
  %v2873 = vpop.f32.mrb[0].mxu0
  %v2874 = vadd.f32 %v2741, %v2873
  %v2875 = vpop.f32.mrb[0].mxu0
  %v2876 = vpop.f32.mrb[0].mxu0
  %v2877 = vadd.f32 %v2741, %v2876
  %v2878 = vpop.f32.mrb[0].mxu0
  %2879 = vmatprep.mubr.bf16.mxu0 0
  %2880 = vmatmul.mubr.bf16.gmra.mrb[0].mxu0 %v2719
  %v2881 = vpop.f32.mrb[0].mxu0
  %v2882 = vadd.f32 %v2741, %v2881
  %v2883 = vpop.f32.mrb[0].mxu0
  %v2884 = vpop.f32.mrb[0].mxu0
  %v2885 = vadd.f32 %v2741, %v2884
  %v2886 = vpop.f32.mrb[0].mxu0
  %2887 = vdwg.mxu0
  %v2888 = vmul.f32 %v2826, %v2826
  %v2889 = vmul.f32 %v2829, %v2829
  %v2890 = vmul.f32 %v2834, %v2834
  %v2891 = vmul.f32 %v2837, %v2837
  %v2892 = vmul.f32 %v2842, %v2842
  %v2893 = vmul.f32 %v2845, %v2845
  %v2894 = vmul.f32 %v2850, %v2850
  %v2895 = vmul.f32 %v2853, %v2853
  %v2896 = vmul.f32 %v2858, %v2858
  %v2897 = vmul.f32 %v2861, %v2861
  %v2898 = vmul.f32 %v2866, %v2866
  %v2899 = vmul.f32 %v2869, %v2869
  %v2900 = vmul.f32 %v2874, %v2874
  %v2901 = vmul.f32 %v2877, %v2877
  %v2902 = vmul.f32 %v2882, %v2882
  %v2903 = vmul.f32 %v2885, %v2885
  %v2904 = vsel %vm1631, %v2888, 0.0
  %v2905 = vsel %vm1632, %v2889, 0.0
  %v2906 = vsel %vm1633, %v2890, 0.0
  %v2907 = vsel %vm1634, %v2891, 0.0
  %v2908 = vsel %vm1635, %v2892, 0.0
  %v2909 = vsel %vm1636, %v2893, 0.0
  %v2910 = vsel %vm1637, %v2894, 0.0
  %v2911 = vsel %vm1638, %v2895, 0.0
  %v2912 = vsel %vm1639, %v2896, 0.0
  %v2913 = vsel %vm1640, %v2897, 0.0
  %v2914 = vsel %vm1641, %v2898, 0.0
  %v2915 = vsel %vm1642, %v2899, 0.0
  %v2916 = vsel %vm1643, %v2900, 0.0
  %v2917 = vsel %vm1644, %v2901, 0.0
  %v2918 = vsel %vm1645, %v2902, 0.0
  %v2919 = vsel %vm1646, %v2903, 0.0
  %vm2920 = vcmp.eq.s32.totalorder %v94, 3
  %v2921 = vadd.f32 %v2904, %v2905
  %v2922 = vadd.f32 %v2921, %v2906
  %v2923 = vadd.f32 %v2922, %v2907
  %v2924 = vadd.f32 %v2923, %v2908
  %v2925 = vadd.f32 %v2924, %v2909
  %v2926 = vadd.f32 %v2925, %v2910
  %v2927 = vadd.f32 %v2926, %v2911
  %v2928 = vadd.f32 %v2927, %v2912
  %v2929 = vadd.f32 %v2928, %v2913
  %v2930 = vadd.f32 %v2929, %v2914
  %v2931 = vadd.f32 %v2930, %v2915
  %v2932 = vadd.f32 %v2931, %v2916
  %v2933 = vadd.f32 %v2932, %v2917
  %v2934 = vadd.f32 %v2933, %v2918
  %v2935 = vadd.f32 %v2934, %v2919
  %2936 = vadd.xlane.f32.xlu0 %v2935
  %v2937 = vpop.xlane.xlu0 %2936
  %v2938 = vrot.slane %v2937, 4
  %v2939 = vadd.f32 %v2937, %v2938
  %v2940 = vrot.slane %v2939, 2
  %v2941 = vadd.f32 %v2939, %v2940
  %v2942 = vrot.slane %v2941, 1
  %v2943 = vadd.f32 %v2941, %v2942
  %s2944 = vtos %v2943
  %v2945 = vstv %s2944
  %v2946 = vsel %vm2920, %v2945, %v2599
  %v2947 = vxor.u32 %v2826, 2147483648
  %v2948 = vxor.u32 %v2829, 2147483648
  %v2949 = vxor.u32 %v2834, 2147483648
  %v2950 = vxor.u32 %v2837, 2147483648
  %v2951 = vxor.u32 %v2842, 2147483648
  %v2952 = vxor.u32 %v2845, 2147483648
  %v2953 = vxor.u32 %v2850, 2147483648
  %v2954 = vxor.u32 %v2853, 2147483648
  %v2955 = vxor.u32 %v2858, 2147483648
  %v2956 = vxor.u32 %v2861, 2147483648
  %v2957 = vxor.u32 %v2866, 2147483648
  %v2958 = vxor.u32 %v2869, 2147483648
  %v2959 = vxor.u32 %v2874, 2147483648
  %v2960 = vxor.u32 %v2877, 2147483648
  %v2961 = vxor.u32 %v2882, 2147483648
  %v2962 = vxor.u32 %v2885, 2147483648
  %v2963 = vmul.f32 %v2947, 1.442695
  %v2964 = vpow.pop %v2963
  %v2965 = vmul.f32 %v2948, 1.442695
  %v2966 = vpow.pop %v2965
  %v2967 = vmul.f32 %v2949, 1.442695
  %v2968 = vpow.pop %v2967
  %v2969 = vmul.f32 %v2950, 1.442695
  %v2970 = vpow.pop %v2969
  %v2971 = vmul.f32 %v2951, 1.442695
  %v2972 = vpow.pop %v2971
  %v2973 = vmul.f32 %v2952, 1.442695
  %v2974 = vpow.pop %v2973
  %v2975 = vmul.f32 %v2953, 1.442695
  %v2976 = vpow.pop %v2975
  %v2977 = vmul.f32 %v2954, 1.442695
  %v2978 = vpow.pop %v2977
  %v2979 = vmul.f32 %v2955, 1.442695
  %v2980 = vpow.pop %v2979
  %v2981 = vmul.f32 %v2956, 1.442695
  %v2982 = vpow.pop %v2981
  %v2983 = vmul.f32 %v2957, 1.442695
  %v2984 = vpow.pop %v2983
  %v2985 = vmul.f32 %v2958, 1.442695
  %v2986 = vpow.pop %v2985
  %v2987 = vmul.f32 %v2959, 1.442695
  %v2988 = vpow.pop %v2987
  %v2989 = vmul.f32 %v2960, 1.442695
  %v2990 = vpow.pop %v2989
  %v2991 = vmul.f32 %v2961, 1.442695
  %v2992 = vpow.pop %v2991
  %v2993 = vmul.f32 %v2962, 1.442695
  %v2994 = vpow.pop %v2993
  %v2995 = vadd.f32 %v2964, 1.0
  %v2996 = vadd.f32 %v2966, 1.0
  %v2997 = vadd.f32 %v2968, 1.0
  %v2998 = vadd.f32 %v2970, 1.0
  %v2999 = vadd.f32 %v2972, 1.0
  %v3000 = vadd.f32 %v2974, 1.0
  %v3001 = vadd.f32 %v2976, 1.0
  %v3002 = vadd.f32 %v2978, 1.0
  %v3003 = vadd.f32 %v2980, 1.0
  %v3004 = vadd.f32 %v2982, 1.0
  %v3005 = vadd.f32 %v2984, 1.0
  %v3006 = vadd.f32 %v2986, 1.0
  %v3007 = vadd.f32 %v2988, 1.0
  %v3008 = vadd.f32 %v2990, 1.0
  %v3009 = vadd.f32 %v2992, 1.0
  %v3010 = vadd.f32 %v2994, 1.0
  %v3011 = vrcp.pop %v2995
  %v3012 = vmul.f32 1.0, %v3011
  %v3013 = vrcp.pop %v2996
  %v3014 = vmul.f32 1.0, %v3013
  %v3015 = vrcp.pop %v2997
  %v3016 = vmul.f32 1.0, %v3015
  %v3017 = vrcp.pop %v2998
  %v3018 = vmul.f32 1.0, %v3017
  %v3019 = vrcp.pop %v2999
  %v3020 = vmul.f32 1.0, %v3019
  %v3021 = vrcp.pop %v3000
  %v3022 = vmul.f32 1.0, %v3021
  %v3023 = vrcp.pop %v3001
  %v3024 = vmul.f32 1.0, %v3023
  %v3025 = vrcp.pop %v3002
  %v3026 = vmul.f32 1.0, %v3025
  %v3027 = vrcp.pop %v3003
  %v3028 = vmul.f32 1.0, %v3027
  %v3029 = vrcp.pop %v3004
  %v3030 = vmul.f32 1.0, %v3029
  %v3031 = vrcp.pop %v3005
  %v3032 = vmul.f32 1.0, %v3031
  %v3033 = vrcp.pop %v3006
  %v3034 = vmul.f32 1.0, %v3033
  %v3035 = vrcp.pop %v3007
  %v3036 = vmul.f32 1.0, %v3035
  %v3037 = vrcp.pop %v3008
  %v3038 = vmul.f32 1.0, %v3037
  %v3039 = vrcp.pop %v3009
  %v3040 = vmul.f32 1.0, %v3039
  %v3041 = vrcp.pop %v3010
  %v3042 = vmul.f32 1.0, %v3041
  %3043 = vst [vmem:[%s13] sm:$0xff] %v3012
  %3044 = vst [vmem:[%s13 + $0x8] sm:$0xff] %v3014
  %3045 = vst [vmem:[%s13 + $0x10] sm:$0xff] %v3016
  %3046 = vst [vmem:[%s13 + $0x18] sm:$0xff] %v3018
  %3047 = vst [vmem:[%s13 + $0x20] sm:$0xff] %v3020
  %3048 = vst [vmem:[%s13 + $0x28] sm:$0xff] %v3022
  %3049 = vst [vmem:[%s13 + $0x30] sm:$0xff] %v3024
  %3050 = vst [vmem:[%s13 + $0x38] sm:$0xff] %v3026
  %3051 = vst [vmem:[%s13 + $0x40] sm:$0xff] %v3028
  %3052 = vst [vmem:[%s13 + $0x48] sm:$0xff] %v3030
  %3053 = vst [vmem:[%s13 + $0x50] sm:$0xff] %v3032
  %3054 = vst [vmem:[%s13 + $0x58] sm:$0xff] %v3034
  %3055 = vst [vmem:[%s13 + $0x60] sm:$0xff] %v3036
  %3056 = vst [vmem:[%s13 + $0x68] sm:$0xff] %v3038
  %3057 = vst [vmem:[%s13 + $0x70] sm:$0xff] %v3040
  %3058 = vst [vmem:[%s13 + $0x78] sm:$0xff] %v3042
  %3059 = vst [vmem:[%s14] sm:$0xff] %v2946
  // Predicated region
  $region38: #{ska_forward.1} parent=0 // pred_check
    _
  $region39: #{ska_forward.1} parent=0 // pred_check_branch
    %3061 = sbr.rel (0) target = $region41
  $region40: #{ska_forward.1} parent=0 // pred_region
    _
  $region41: #{ska_forward.1} parent=0 // pred_fallthru
    _
  // Predicated region
  $region42: #{ska_forward.1} parent=0 // pred_check
    _
  $region43: #{ska_forward.1} parent=0 // pred_check_branch
    %3063 = sbr.rel (0) target = $region45
  $region44: #{ska_forward.1} parent=0 // pred_region
    _
  $region45: #{ska_forward.1} parent=0 // pred_fallthru
    _
  // Predicated region
  $region46: #{ska_forward.1} parent=0 // pred_check
    _
  $region47: #{ska_forward.1} parent=0 // pred_check_branch
    %3065 = sbr.rel (0) target = $region49
  $region48: #{ska_forward.1} parent=0 // pred_region
    _
  $region49: #{ska_forward.1} parent=0 // pred_fallthru
    _
  // Predicated region
  $region50: #{ska_forward.1} parent=0 // pred_check
    _
  $region51: #{ska_forward.1} parent=0 // pred_check_branch
    %3067 = sbr.rel (0) target = $region53
  $region52: #{ska_forward.1} parent=0 // pred_region
    _
  $region53: #{ska_forward.1} parent=0 // pred_fallthru
    _
  // Predicated region
  $region54: #{ska_forward.1} parent=0 // pred_check
    _
  $region55: #{ska_forward.1} parent=0 // pred_check_branch
    %3069 = sbr.rel (0) target = $region57
  $region56: #{ska_forward.1} parent=0 // pred_region
    _
  $region57: #{ska_forward.1} parent=0 // pred_fallthru
    _
  // Predicated region
  $region58: #{ska_forward.1} parent=0 // pred_check
    _
  $region59: #{ska_forward.1} parent=0 // pred_check_branch
    %3071 = sbr.rel (0) target = $region61
  $region60: #{ska_forward.1} parent=0 // pred_region
    _
  $region61: #{ska_forward.1} parent=0 // pred_fallthru
    _
  // Predicated region
  $region62: #{ska_forward.1} parent=0 // pred_check
    _
  $region63: #{ska_forward.1} parent=0 // pred_check_branch
    %3073 = sbr.rel (0) target = $region65
  $region64: #{ska_forward.1} parent=0 // pred_region
    _
  $region65: #{ska_forward.1} parent=0 // pred_fallthru
    _
  // Predicated region
  $region66: #{ska_forward.1} parent=0 // pred_check
    _
  $region67: #{ska_forward.1} parent=0 // pred_check_branch
    %3075 = sbr.rel (0) target = $region69
  $region68: #{ska_forward.1} parent=0 // pred_region
    _
  $region69: #{ska_forward.1} parent=0 // pred_fallthru
    _
  // Predicated region
  $region70: #{ska_forward.1} parent=0 // pred_check
    _
  $region71: #{ska_forward.1} parent=0 // pred_check_branch
    %3077 = sbr.rel (0) target = $region73
  $region72: #{ska_forward.1} parent=0 // pred_region
    _
  $region73: #{ska_forward.1} parent=0 // pred_fallthru
    _
  // Predicated region
  $region74: #{ska_forward.1} parent=0 // pred_check
    _
  $region75: #{ska_forward.1} parent=0 // pred_check_branch
    %3079 = sbr.rel (0) target = $region77
  $region76: #{ska_forward.1} parent=0 // pred_region
    _
  $region77: #{ska_forward.1} parent=0 // pred_fallthru
    _

</llo_original>
